<compile_context>
chip_gen: v7x
topology: tpu7x:2x2x1
jax: 0.10.0
libtpu: 0.0.40
codegen_flags: <defaults>
</compile_context>

<pallas_src>
import functools
import math

import jax
import jax.numpy as jnp
import numpy as np
from jax.experimental import pallas as pl
from jax.experimental.pallas import tpu as pltpu


def _fint_attention_kernel(x_ref, wq_ref, wk_ref, wv_ref, wp_ref, bp_ref,
                           *out_and_scratch,
                           group_size, head_dim, q_block,
                           compute_dtype, approx_recip, emit_attnw):
    # x_ref:     (1, T, E)        hidden states for batch b (resident across qt, hg)
    # wq/wk/wv:  (1, E, G*d)      per-head-group slabs of the fused qkv weight (no bias);
    #                             1/sqrt(d) is already folded into wq.
    # wp_ref:    (1, G*d, E)      per-head-group slab of the output projection weight
    # bp_ref:    (1, E)           output projection bias (f32)
    # out_ref:   (1, Tq, E)       written once at the last head group
    # attnw_ref: (1, G, Tq, T)    this group's attention probabilities (optional)
    # acc_ref:   (Tq, E) f32      scratch accumulator over the head-group axis
    if emit_attnw:
        out_ref, attnw_ref, acc_ref = out_and_scratch
    else:
        out_ref, acc_ref = out_and_scratch
        attnw_ref = None

    qt = pl.program_id(1)
    hg = pl.program_id(2)
    T = x_ref.shape[1]
    E = x_ref.shape[2]
    G = group_size
    d = head_dim
    Tq = q_block

    # Cast the resident hidden block once; every matmul takes compute_dtype MXU inputs.
    q_start = pl.multiple_of(qt * Tq, Tq)
    x = x_ref[0].astype(compute_dtype)                                  # (T, E)  K/V rows
    xq = x_ref[0, pl.ds(q_start, Tq), :].astype(compute_dtype)          # (Tq, E) Q rows

    # Per-group projections, f32 accumulation on the MXU (lane width G*d).
    q = jnp.dot(xq, wq_ref[0], preferred_element_type=jnp.float32)      # (Tq, G*d)  scaled
    k = jnp.dot(x, wk_ref[0], preferred_element_type=jnp.float32)       # (T,  G*d)
    v = jnp.dot(x, wv_ref[0], preferred_element_type=jnp.float32)       # (T,  G*d)

    qg = jnp.transpose(q.reshape(Tq, G, d), (1, 0, 2)).astype(compute_dtype)  # (G, Tq, d)
    kg = jnp.transpose(k.reshape(T, G, d), (1, 0, 2)).astype(compute_dtype)   # (G, T,  d)
    vg = jnp.transpose(v.reshape(T, G, d), (1, 0, 2)).astype(compute_dtype)   # (G, T,  d)

    # scores[g] = q_g @ k_g^T, batched over the G heads of this group (f32 accumulate).
    scores = jax.lax.dot_general(
        qg, kg,
        dimension_numbers=(((2,), (2,)), ((0,), (0,))),
        preferred_element_type=jnp.float32)                              # (G, Tq, T)

    # Causal mask from a single (Tq,1) vs (1,T) iota compare with the query-tile offset.
    row = jax.lax.broadcasted_iota(jnp.int32, (Tq, 1), 0) + q_start
    col = jax.lax.broadcasted_iota(jnp.int32, (1, T), 1)
    causal = row >= col                                                  # (Tq, T)
    mask_value = jnp.finfo(jnp.float32).min
    scores = jnp.where(causal[None, :, :], scores, mask_value)

    # Numerically-stable softmax along keys (elementwise math kept in f32 on all chips).
    m = jnp.max(scores, axis=-1, keepdims=True)                          # (G, Tq, 1)
    e = jnp.exp(scores - m)
    denom = jnp.sum(e, axis=-1, keepdims=True)

    if emit_attnw:
        if approx_recip:
            probs = e * pl.reciprocal(denom, approx=True)                # EUP slot
        else:
            probs = e / denom
        attnw_ref[0] = probs.astype(attnw_ref.dtype)
        ctx = jax.lax.dot_general(
            probs.astype(compute_dtype), vg,
            dimension_numbers=(((2,), (1,)), ((0,), (0,))),
            preferred_element_type=jnp.float32)                          # (G, Tq, d)
    else:
        # Deferred normalization: scale the (Tq, d) context instead of (Tq, T) probs.
        ctx = jax.lax.dot_general(
            e.astype(compute_dtype), vg,
            dimension_numbers=(((2,), (1,)), ((0,), (0,))),
            preferred_element_type=jnp.float32)                          # (G, Tq, d)
        if approx_recip:
            ctx = ctx * pl.reciprocal(denom, approx=True)
        else:
            ctx = ctx / denom

    # Back to the (h d)-concatenated layout for the output projection slab.
    ctx2 = jnp.transpose(ctx, (1, 0, 2)).reshape(Tq, G * d)              # (Tq, G*d)
    y = jnp.dot(ctx2.astype(compute_dtype), wp_ref[0],
                preferred_element_type=jnp.float32)                      # (Tq, E)

    @pl.when(hg == 0)
    def _():
        acc_ref[...] = jnp.broadcast_to(bp_ref[...].astype(jnp.float32), (Tq, E))

    acc_ref[...] += y

    @pl.when(hg == pl.num_programs(2) - 1)
    def _():
        out_ref[0] = acc_ref[...].astype(out_ref.dtype)                  # single lane-dense store


def _pick_group_size(num_heads, head_dim, target_lanes=256):
    """Smallest divisor G of num_heads with G*head_dim >= target (clamped to num_heads)."""
    for g in range(1, num_heads + 1):
        if num_heads % g == 0 and g * head_dim >= target_lanes:
            return g
    return num_heads


def _pick_q_block(seq_len, target=256):
    """Largest multiple of 8 that divides seq_len and is <= target (else the full seq)."""
    if seq_len <= target:
        return seq_len
    for tq in range(target, 7, -8):
        if seq_len % tq == 0:
            return tq
    return seq_len


def fint_attention(hidden, w_fused, w_proj, b_proj, num_heads, *,
                   compute_dtype=jnp.bfloat16, approx_recip=True,
                   attnw_dtype=jnp.bfloat16, return_attn_weights=True,
                   head_group=None, q_block=None):
    """hidden: (B, T, E); w_fused: (E, 3E); w_proj: (E, E); b_proj: (1, E).

    compute_dtype:       MXU input dtype for all four matmuls (f32 accumulation).
    approx_recip:        use the EUP approximate reciprocal for softmax normalization.
    attnw_dtype:         storage dtype of the attention-weights output (bf16 halves HBM/VMEM).
    return_attn_weights: if False, the attnw output (the dominant HBM stream for T >> E)
                         is skipped entirely and normalization is deferred to the context.
    head_group:          heads processed per grid step (default: targets G*d >= 256).
    q_block:             query-tile rows per grid step (default: <= 256, divides T).
    """
    B, T, E = hidden.shape
    H = num_heads
    if E % H != 0:
        raise ValueError(f"hidden_size {E} must be divisible by num_heads {H}")
    d = E // H

    G = head_group if head_group is not None else _pick_group_size(H, d)
    if H % G != 0:
        raise ValueError(f"num_heads {H} must be divisible by head_group {G}")
    HG = H // G
    Gd = G * d

    Tq = q_block if q_block is not None else _pick_q_block(T)
    if T % Tq != 0:
        raise ValueError(f"seq_len {T} must be divisible by q_block {Tq}")
    QT = T // Tq

    # Per-head-group weight slabs, pre-cast to compute_dtype; scale folded into Wq.
    # w_fused columns are [q | k | v] of width E each; head h owns cols h*d:(h+1)*d.
    scale = 1.0 / math.sqrt(d)
    wf = w_fused.reshape(E, 3, H, d)

    def group(w):                                   # (E, H, d) -> (HG, E, G*d)
        return jnp.transpose(w.reshape(E, HG, Gd), (1, 0, 2))

    wq = group(wf[:, 0] * scale).astype(compute_dtype)
    wk = group(wf[:, 1]).astype(compute_dtype)
    wv = group(wf[:, 2]).astype(compute_dtype)
    wp = w_proj.reshape(HG, Gd, E).astype(compute_dtype)   # rows hg*Gd:(hg+1)*Gd
    bp = b_proj.reshape(1, E).astype(jnp.float32)

    kernel = functools.partial(
        _fint_attention_kernel,
        group_size=G, head_dim=d, q_block=Tq,
        compute_dtype=compute_dtype, approx_recip=approx_recip,
        emit_attnw=return_attn_weights)

    out_shapes = [jax.ShapeDtypeStruct((B, T, E), hidden.dtype)]
    out_specs = [pl.BlockSpec((1, Tq, E), lambda b, qt, hg: (b, qt, 0))]
    if return_attn_weights:
        out_shapes.append(jax.ShapeDtypeStruct((B, H, T, T), attnw_dtype))
        out_specs.append(pl.BlockSpec((1, G, Tq, T), lambda b, qt, hg: (b, hg, qt, 0)))

    # Rough scoped-VMEM estimate from actual tile sizes (double-buffered blocks +
    # scratch + f32 softmax temporaries), clamped to stay well under v7x's 64 MiB
    # physical VMEM per TensorCore.  Tq / G should be chosen so this fits.
    def _nbytes(shape, dtype):
        return int(np.prod(shape)) * jnp.dtype(dtype).itemsize

    est = 0
    est += 2 * _nbytes((T, E), hidden.dtype)                 # hidden block
    est += 2 * 3 * _nbytes((E, Gd), compute_dtype)           # Wq/Wk/Wv slabs
    est += 2 * _nbytes((Gd, E), compute_dtype)               # Wp slab
    est += 2 * _nbytes((1, E), jnp.float32)                  # bias
    est += 2 * _nbytes((Tq, E), hidden.dtype)                # out block
    if return_attn_weights:
        est += 2 * _nbytes((G, Tq, T), attnw_dtype)          # attnw block
    est += _nbytes((Tq, E), jnp.float32)                     # f32 accumulator scratch
    est += 3 * _nbytes((G, Tq, T), jnp.float32)              # scores / exp / probs temporaries
    est += 2 * _nbytes((T, Gd), jnp.float32) + _nbytes((Tq, Gd), jnp.float32)   # q/k/v tiles
    vmem_limit = int(min(max(2 * est, 32 * 1024 * 1024), 40 * 1024 * 1024))

    res = pl.pallas_call(
        kernel,
        out_shape=tuple(out_shapes),
        grid_spec=pltpu.PrefetchScalarGridSpec(
            num_scalar_prefetch=0,
            grid=(B, QT, HG),
            in_specs=[
                pl.BlockSpec((1, T, E), lambda b, qt, hg: (b, 0, 0)),    # hidden (resident per b)
                pl.BlockSpec((1, E, Gd), lambda b, qt, hg: (hg, 0, 0)),  # Wq group slab (scaled)
                pl.BlockSpec((1, E, Gd), lambda b, qt, hg: (hg, 0, 0)),  # Wk group slab
                pl.BlockSpec((1, E, Gd), lambda b, qt, hg: (hg, 0, 0)),  # Wv group slab
                pl.BlockSpec((1, Gd, E), lambda b, qt, hg: (hg, 0, 0)),  # Wp group slab
                pl.BlockSpec((1, E), lambda b, qt, hg: (0, 0)),          # proj bias
            ],
            out_specs=tuple(out_specs),
            scratch_shapes=[pltpu.VMEM((Tq, E), jnp.float32)],           # f32 output accumulator
        ),
        compiler_params=pltpu.CompilerParams(
            # batch and query-tile are independent (two parallel axes -> both v7x
            # TensorCores busy even at B=1); head-group accumulates into the scratch
            # so it must stay "arbitrary" and innermost.
            dimension_semantics=("parallel", "parallel", "arbitrary"),
            vmem_limit_bytes=vmem_limit,
        ),
    )(hidden, wq, wk, wv, wp, bp)

    if return_attn_weights:
        out, attnw = res
        return out, attnw
    (out,) = res
    return out, None


def _reference(hidden, w_fused, w_proj, b_proj, num_heads):
    """Pure-JAX reference mirroring the PyTorch forward (eval mode, no attention_mask)."""
    B, T, E = hidden.shape
    d = E // num_heads
    qkv = hidden @ w_fused                                  # (B, T, 3E)
    q, k, v = jnp.split(qkv, 3, axis=-1)

    def heads(x):  # (B, T, E) -> (B, H, T, d)
        return x.reshape(B, T, num_heads, d).transpose(0, 2, 1, 3)

    q, k, v = heads(q), heads(k), heads(v)
    scores = jnp.einsum("bhqd,bhkd->bhqk", q, k) / (d ** 0.5)
    causal = jnp.tril(jnp.ones((T, T), dtype=bool))[None, None]
    scores = jnp.where(causal, scores, jnp.finfo(jnp.float32).min)
    w = jax.nn.softmax(scores, axis=-1)
    ctx = jnp.einsum("bhqk,bhkd->bhqd", w, v)               # (B, H, T, d)
    ctx = ctx.transpose(0, 2, 1, 3).reshape(B, T, E)
    out = ctx @ w_proj + b_proj
    return out, w


if __name__ == "__main__":
    # Small shapes consistent with the module: hidden_size=32, num_heads=4, seq=8, batch=2.
    B, T, E, H = 2, 8, 32, 4

    key = jax.random.PRNGKey(0)
    k1, k2, k3, k4 = jax.random.split(key, 4)

    hidden = jax.random.normal(k1, (B, T, E), dtype=jnp.float32)
    # PyTorch shapes: fused (3E, E), proj (E, E) + bias, passed pre-transposed to (in, out).
    w_fused = jax.random.normal(k2, (E, 3 * E), dtype=jnp.float32) * (1.0 / math.sqrt(E))
    w_proj = jax.random.normal(k3, (E, E), dtype=jnp.float32) * (1.0 / math.sqrt(E))
    b_proj = jax.random.normal(k4, (1, E), dtype=jnp.float32) * 0.01

    ref_out, ref_attnw = _reference(hidden, w_fused, w_proj, b_proj, H)

    # 1) High-fidelity path: f32 MXU inputs, exact reciprocal, f32 attnw — tight check.
    out32, attnw32 = fint_attention(hidden, w_fused, w_proj, b_proj, H,
                                    compute_dtype=jnp.float32,
                                    approx_recip=False,
                                    attnw_dtype=jnp.float32)
    jax.block_until_ready(out32)
    jax.block_until_ready(attnw32)
    np.testing.assert_allclose(np.asarray(out32), np.asarray(ref_out), rtol=2e-4, atol=2e-4)
    np.testing.assert_allclose(np.asarray(attnw32), np.asarray(ref_attnw), rtol=2e-4, atol=2e-4)

    # 2) Fast path (defaults): bf16 MXU inputs for all matmuls, approximate reciprocal,
    #    bf16 attention-weights output — looser tolerance.
    out16, attnw16 = fint_attention(hidden, w_fused, w_proj, b_proj, H)
    jax.block_until_ready(out16)
    jax.block_until_ready(attnw16)
    np.testing.assert_allclose(np.asarray(out16), np.asarray(ref_out), rtol=1e-1, atol=1e-1)
    np.testing.assert_allclose(np.asarray(attnw16).astype(np.float32), np.asarray(ref_attnw),
                               rtol=1e-1, atol=1e-1)

    # 3) attnw-skipping path, exercising multiple head groups and multiple query tiles
    #    (T=16, head_group=2, q_block=8) with deferred softmax normalization.
    B2, T2 = 1, 16
    hidden2 = jax.random.normal(jax.random.PRNGKey(1), (B2, T2, E), dtype=jnp.float32)
    ref2_out, _ = _reference(hidden2, w_fused, w_proj, b_proj, H)
    out2, attnw_none = fint_attention(hidden2, w_fused, w_proj, b_proj, H,
                                      compute_dtype=jnp.float32,
                                      approx_recip=False,
                                      return_attn_weights=False,
                                      head_group=2, q_block=8)
    jax.block_until_ready(out2)
    assert attnw_none is None
    np.testing.assert_allclose(np.asarray(out2), np.asarray(ref2_out), rtol=2e-4, atol=2e-4)

    print("KERNEL_OK")
</pallas_src>

<mosaic_0001>
module attributes {stable_mosaic.version = 11 : i64} {
  func.func @_fint_attention_kernel(%arg0: i32, %arg1: i32, %arg2: i32, %arg3: memref<1x8x32xf32, #tpu.memory_space<vmem>>, %arg4: memref<1x32x32xf32, #tpu.memory_space<vmem>>, %arg5: memref<1x32x32xf32, #tpu.memory_space<vmem>>, %arg6: memref<1x32x32xf32, #tpu.memory_space<vmem>>, %arg7: memref<1x32x32xf32, #tpu.memory_space<vmem>>, %arg8: memref<1x32xf32, #tpu.memory_space<vmem>>, %arg9: memref<1x8x32xf32, #tpu.memory_space<vmem>>, %arg10: memref<1x4x8x8xf32, #tpu.memory_space<vmem>>, %arg11: memref<8x32xf32, #tpu.memory_space<vmem>>) attributes {dimension_semantics = [#tpu.dimension_semantics<parallel>, #tpu.dimension_semantics<parallel>, #tpu.dimension_semantics<arbitrary>], iteration_bounds = array<i64: 2, 1, 1>, scalar_prefetch = 0 : i64, scratch_operands = 1 : i64, tpu.core_type = #tpu.core_type<tc>, window_params = [{transform_indices = @transform_0, window_bounds = array<i64: 1, 8, 32>}, {transform_indices = @transform_1, window_bounds = array<i64: 1, 32, 32>}, {transform_indices = @transform_2, window_bounds = array<i64: 1, 32, 32>}, {transform_indices = @transform_3, window_bounds = array<i64: 1, 32, 32>}, {transform_indices = @transform_4, window_bounds = array<i64: 1, 32, 32>}, {pipeline_mode = #tpu.pipeline_mode<synchronous>, transform_indices = @transform_5, window_bounds = array<i64: 1, 32>}, {transform_indices = @transform_6, window_bounds = array<i64: 1, 8, 32>}, {transform_indices = @transform_7, window_bounds = array<i64: 1, 4, 8, 8>}]} {
    %c8_i32 = arith.constant 8 : i32
    %0 = arith.muli %arg1, %c8_i32 : i32
    %1 = tpu.assume_multiple %0, 8 : i32
    %c0 = arith.constant 0 : index
    %c0_0 = arith.constant 0 : index
    %c0_1 = arith.constant 0 : index
    %2 = vector.load %arg3[%c0, %c0_0, %c0_1] : memref<1x8x32xf32, #tpu.memory_space<vmem>>, vector<1x8x32xf32>
    %3 = vector.shape_cast %2 : vector<1x8x32xf32> to vector<8x32xf32>
    %c0_2 = arith.constant 0 : index
    %4 = arith.index_cast %1 : i32 to index
    %c0_3 = arith.constant 0 : index
    %5 = vector.load %arg3[%c0_2, %4, %c0_3] : memref<1x8x32xf32, #tpu.memory_space<vmem>>, vector<1x8x32xf32>
    %6 = vector.shape_cast %5 : vector<1x8x32xf32> to vector<8x32xf32>
    %c0_4 = arith.constant 0 : index
    %c0_5 = arith.constant 0 : index
    %c0_6 = arith.constant 0 : index
    %7 = vector.load %arg4[%c0_4, %c0_5, %c0_6] : memref<1x32x32xf32, #tpu.memory_space<vmem>>, vector<1x32x32xf32>
    %8 = vector.shape_cast %7 : vector<1x32x32xf32> to vector<32x32xf32>
    %cst = arith.constant dense<0.000000e+00> : vector<8x32xf32>
    %9 = tpu.matmul %6, %8, %cst {dimension_numbers = #tpu.dot_dimension_numbers<[1], [0], [0], [1], [0, 0, 1, 1], [], []>} : vector<8x32xf32>, vector<32x32xf32>, vector<8x32xf32> -> vector<8x32xf32>
    %c0_7 = arith.constant 0 : index
    %c0_8 = arith.constant 0 : index
    %c0_9 = arith.constant 0 : index
    %10 = vector.load %arg5[%c0_7, %c0_8, %c0_9] : memref<1x32x32xf32, #tpu.memory_space<vmem>>, vector<1x32x32xf32>
    %11 = vector.shape_cast %10 : vector<1x32x32xf32> to vector<32x32xf32>
    %cst_10 = arith.constant dense<0.000000e+00> : vector<8x32xf32>
    %12 = tpu.matmul %3, %11, %cst_10 {dimension_numbers = #tpu.dot_dimension_numbers<[1], [0], [0], [1], [0, 0, 1, 1], [], []>} : vector<8x32xf32>, vector<32x32xf32>, vector<8x32xf32> -> vector<8x32xf32>
    %c0_11 = arith.constant 0 : index
    %c0_12 = arith.constant 0 : index
    %c0_13 = arith.constant 0 : index
    %13 = vector.load %arg6[%c0_11, %c0_12, %c0_13] : memref<1x32x32xf32, #tpu.memory_space<vmem>>, vector<1x32x32xf32>
    %14 = vector.shape_cast %13 : vector<1x32x32xf32> to vector<32x32xf32>
    %cst_14 = arith.constant dense<0.000000e+00> : vector<8x32xf32>
    %15 = tpu.matmul %3, %14, %cst_14 {dimension_numbers = #tpu.dot_dimension_numbers<[1], [0], [0], [1], [0, 0, 1, 1], [], []>} : vector<8x32xf32>, vector<32x32xf32>, vector<8x32xf32> -> vector<8x32xf32>
    %16 = vector.shape_cast %9 : vector<8x32xf32> to vector<8x4x8xf32>
    %17 = tpu.transpose %16, [1, 0, 2] : vector<8x4x8xf32> -> vector<4x8x8xf32>
    %18 = vector.shape_cast %12 : vector<8x32xf32> to vector<8x4x8xf32>
    %19 = tpu.transpose %18, [1, 0, 2] : vector<8x4x8xf32> -> vector<4x8x8xf32>
    %20 = vector.shape_cast %15 : vector<8x32xf32> to vector<8x4x8xf32>
    %21 = tpu.transpose %20, [1, 0, 2] : vector<8x4x8xf32> -> vector<4x8x8xf32>
    %cst_15 = arith.constant dense<0.000000e+00> : vector<4x8x8xf32>
    %22 = tpu.matmul %17, %19, %cst_15 {dimension_numbers = #tpu.dot_dimension_numbers<[2], [2], [1], [1], [0, 0, 0, 1, 1, 1], [0], [0]>} : vector<4x8x8xf32>, vector<4x8x8xf32>, vector<4x8x8xf32> -> vector<4x8x8xf32>
    %23 = tpu.iota {dimensions = array<i32: 0>} : vector<8x1xi32>
    %24 = vector.broadcast %1 : i32 to vector<8x1xi32>
    %25 = arith.addi %23, %24 : vector<8x1xi32>
    %26 = tpu.iota {dimensions = array<i32: 1>} : vector<1x8xi32>
    %27 = vector.broadcast %25 : vector<8x1xi32> to vector<8x8xi32>
    %28 = vector.broadcast %26 : vector<1x8xi32> to vector<8x8xi32>
    %29 = arith.cmpi sge, %27, %28 : vector<8x8xi32>
    %30 = vector.shape_cast %29 : vector<8x8xi1> to vector<1x8x8xi1>
    %cst_16 = arith.constant -3.40282347E+38 : f32
    %31 = vector.shape_cast %30 : vector<1x8x8xi1> to vector<1x8x8xi1>
    %32 = vector.broadcast %31 : vector<1x8x8xi1> to vector<4x8x8xi1>
    %33 = vector.broadcast %cst_16 : f32 to vector<4x8x8xf32>
    %34 = arith.select %32, %22, %33 : vector<4x8x8xi1>, vector<4x8x8xf32>
    %cst_17 = arith.constant dense<0xFF800000> : vector<4x8xf32>
    %35 = vector.multi_reduction <maximumf>, %34, %cst_17 [2] : vector<4x8x8xf32> to vector<4x8xf32>
    %36 = vector.shape_cast %35 : vector<4x8xf32> to vector<4x8x1xf32>
    %37 = vector.broadcast %36 : vector<4x8x1xf32> to vector<4x8x8xf32>
    %38 = arith.subf %34, %37 : vector<4x8x8xf32>
    %39 = math.exp %38 : vector<4x8x8xf32>
    %cst_18 = arith.constant dense<0.000000e+00> : vector<4x8xf32>
    %40 = vector.multi_reduction <add>, %39, %cst_18 [2] : vector<4x8x8xf32> to vector<4x8xf32>
    %41 = vector.shape_cast %40 : vector<4x8xf32> to vector<4x8x1xf32>
    %42 = vector.broadcast %41 : vector<4x8x1xf32> to vector<4x8x8xf32>
    %43 = arith.divf %39, %42 : vector<4x8x8xf32>
    %c0_19 = arith.constant 0 : index
    %c0_20 = arith.constant 0 : index
    %c0_21 = arith.constant 0 : index
    %c0_22 = arith.constant 0 : index
    %44 = vector.load %arg10[%c0_19, %c0_20, %c0_21, %c0_22] : memref<1x4x8x8xf32, #tpu.memory_space<vmem>>, vector<1x4x8x8xf32>
    %45 = vector.shape_cast %44 : vector<1x4x8x8xf32> to vector<4x8x8xf32>
    %46 = vector.shape_cast %43 : vector<4x8x8xf32> to vector<1x4x8x8xf32>
    tpu.vector_store %arg10[%c0_19, %c0_20, %c0_21, %c0_22], %46 {strides = array<i32>} : memref<1x4x8x8xf32, #tpu.memory_space<vmem>>, vector<1x4x8x8xf32>,
    %cst_23 = arith.constant dense<0.000000e+00> : vector<4x8x8xf32>
    %47 = tpu.matmul %43, %21, %cst_23 {dimension_numbers = #tpu.dot_dimension_numbers<[2], [1], [1], [2], [0, 0, 0, 1, 1, 2], [0], [0]>} : vector<4x8x8xf32>, vector<4x8x8xf32>, vector<4x8x8xf32> -> vector<4x8x8xf32>
    %48 = tpu.transpose %47, [1, 0, 2] : vector<4x8x8xf32> -> vector<8x4x8xf32>
    %49 = vector.shape_cast %48 : vector<8x4x8xf32> to vector<8x32xf32>
    %c0_24 = arith.constant 0 : index
    %c0_25 = arith.constant 0 : index
    %c0_26 = arith.constant 0 : index
    %50 = vector.load %arg7[%c0_24, %c0_25, %c0_26] : memref<1x32x32xf32, #tpu.memory_space<vmem>>, vector<1x32x32xf32>
    %51 = vector.shape_cast %50 : vector<1x32x32xf32> to vector<32x32xf32>
    %cst_27 = arith.constant dense<0.000000e+00> : vector<8x32xf32>
    %52 = tpu.matmul %49, %51, %cst_27 {dimension_numbers = #tpu.dot_dimension_numbers<[1], [0], [0], [1], [0, 0, 1, 1], [], []>} : vector<8x32xf32>, vector<32x32xf32>, vector<8x32xf32> -> vector<8x32xf32>
    %c0_i32 = arith.constant 0 : i32
    %53 = arith.cmpi eq, %arg2, %c0_i32 : i32
    %54 = arith.extui %53 : i1 to i32
    %c0_i32_28 = arith.constant 0 : i32
    %55 = arith.cmpi ne, %54, %c0_i32_28 : i32
    scf.if %55 {
      %c0_35 = arith.constant 0 : index
      %c0_36 = arith.constant 0 : index
      %62 = vector.load %arg8[%c0_35, %c0_36] : memref<1x32xf32, #tpu.memory_space<vmem>>, vector<1x32xf32>
      %63 = vector.shape_cast %62 : vector<1x32xf32> to vector<1x32xf32>
      %64 = vector.broadcast %63 : vector<1x32xf32> to vector<8x32xf32>
      %c0_37 = arith.constant 0 : index
      %c0_38 = arith.constant 0 : index
      %65 = vector.load %arg11[%c0_37, %c0_38] : memref<8x32xf32, #tpu.memory_space<vmem>>, vector<8x32xf32>
      tpu.vector_store %arg11[%c0_37, %c0_38], %64 {strides = array<i32>} : memref<8x32xf32, #tpu.memory_space<vmem>>, vector<8x32xf32>,
    } else {
    }
    %c0_29 = arith.constant 0 : index
    %c0_30 = arith.constant 0 : index
    %56 = vector.load %arg11[%c0_29, %c0_30] : memref<8x32xf32, #tpu.memory_space<vmem>>, vector<8x32xf32>
    %57 = arith.addf %56, %52 : vector<8x32xf32>
    %c0_31 = arith.constant 0 : index
    %c0_32 = arith.constant 0 : index
    %58 = vector.load %arg11[%c0_31, %c0_32] : memref<8x32xf32, #tpu.memory_space<vmem>>, vector<8x32xf32>
    tpu.vector_store %arg11[%c0_31, %c0_32], %57 {strides = array<i32>} : memref<8x32xf32, #tpu.memory_space<vmem>>, vector<8x32xf32>,
    %c0_i32_33 = arith.constant 0 : i32
    %59 = arith.cmpi eq, %arg2, %c0_i32_33 : i32
    %60 = arith.extui %59 : i1 to i32
    %c0_i32_34 = arith.constant 0 : i32
    %61 = arith.cmpi ne, %60, %c0_i32_34 : i32
    scf.if %61 {
      %c0_35 = arith.constant 0 : index
      %c0_36 = arith.constant 0 : index
      %62 = vector.load %arg11[%c0_35, %c0_36] : memref<8x32xf32, #tpu.memory_space<vmem>>, vector<8x32xf32>
      %c0_37 = arith.constant 0 : index
      %c0_38 = arith.constant 0 : index
      %c0_39 = arith.constant 0 : index
      %63 = vector.load %arg9[%c0_37, %c0_38, %c0_39] : memref<1x8x32xf32, #tpu.memory_space<vmem>>, vector<1x8x32xf32>
      %64 = vector.shape_cast %63 : vector<1x8x32xf32> to vector<8x32xf32>
      %65 = vector.shape_cast %62 : vector<8x32xf32> to vector<1x8x32xf32>
      tpu.vector_store %arg9[%c0_37, %c0_38, %c0_39], %65 {strides = array<i32>} : memref<1x8x32xf32, #tpu.memory_space<vmem>>, vector<1x8x32xf32>,
    } else {
    }
    return
  }
  func.func @transform_0(%arg0: i32, %arg1: i32, %arg2: i32) -> (i32, i32, i32) {
    %c0_i32 = arith.constant 0 : i32
    %c0_i32_0 = arith.constant 0 : i32
    %c0_i32_1 = arith.constant 0 : i32
    return %arg0, %c0_i32, %c0_i32_0 : i32, i32, i32
  }
  func.func @transform_1(%arg0: i32, %arg1: i32, %arg2: i32) -> (i32, i32, i32) {
    %c0_i32 = arith.constant 0 : i32
    %c0_i32_0 = arith.constant 0 : i32
    %c0_i32_1 = arith.constant 0 : i32
    return %arg2, %c0_i32, %c0_i32_0 : i32, i32, i32
  }
  func.func @transform_2(%arg0: i32, %arg1: i32, %arg2: i32) -> (i32, i32, i32) {
    %c0_i32 = arith.constant 0 : i32
    %c0_i32_0 = arith.constant 0 : i32
    %c0_i32_1 = arith.constant 0 : i32
    return %arg2, %c0_i32, %c0_i32_0 : i32, i32, i32
  }
  func.func @transform_3(%arg0: i32, %arg1: i32, %arg2: i32) -> (i32, i32, i32) {
    %c0_i32 = arith.constant 0 : i32
    %c0_i32_0 = arith.constant 0 : i32
    %c0_i32_1 = arith.constant 0 : i32
    return %arg2, %c0_i32, %c0_i32_0 : i32, i32, i32
  }
  func.func @transform_4(%arg0: i32, %arg1: i32, %arg2: i32) -> (i32, i32, i32) {
    %c0_i32 = arith.constant 0 : i32
    %c0_i32_0 = arith.constant 0 : i32
    %c0_i32_1 = arith.constant 0 : i32
    return %arg2, %c0_i32, %c0_i32_0 : i32, i32, i32
  }
  func.func @transform_5(%arg0: i32, %arg1: i32, %arg2: i32) -> (i32, i32) {
    %c0_i32 = arith.constant 0 : i32
    %c0_i32_0 = arith.constant 0 : i32
    %c0_i32_1 = arith.constant 0 : i32
    return %c0_i32, %c0_i32_0 : i32, i32
  }
  func.func @transform_6(%arg0: i32, %arg1: i32, %arg2: i32) -> (i32, i32, i32) {
    %c0_i32 = arith.constant 0 : i32
    %c0_i32_0 = arith.constant 0 : i32
    return %arg0, %arg1, %c0_i32 : i32, i32, i32
  }
  func.func @transform_7(%arg0: i32, %arg1: i32, %arg2: i32) -> (i32, i32, i32, i32) {
    %c0_i32 = arith.constant 0 : i32
    %c0_i32_0 = arith.constant 0 : i32
    return %arg0, %arg2, %arg1, %c0_i32 : i32, i32, i32, i32
  }
}

</mosaic_0001>

<llo_original>
// kernel: tpu_custom_call.1
$region0: #{tpu_custom_call.1}
  #allocation0 [shape = 'u32[]', space=smem, size = 0x4, offset = 0x4, fixed_abs, tag = 'smem constant byte address 0x4 - core index']
  #allocation1 [shape = 'u32[144,128]{1,0:T(1,128)}', space=vmem, size = 0x12000, scoped, tag = 'internal scratch']
  #allocation2 [shape = 'f32[8,32]{1,0:T(8,128)}', space=vmem, size = 0x1000, scoped, tag = 'scratch operand']
  %s0 = inlined_call_operand.hbm [shape: f32[2,8,32], index: 0, kind: input, shape index: {}]
  %s1 = inlined_call_operand.hbm [shape: f32[1,32,32], index: 1, kind: input, shape index: {}]
  %s2 = inlined_call_operand.hbm [shape: f32[1,32,32], index: 2, kind: input, shape index: {}]
  %s3 = inlined_call_operand.hbm [shape: f32[1,32,32], index: 3, kind: input, shape index: {}]
  %s4 = inlined_call_operand.hbm [shape: f32[1,32,32], index: 4, kind: input, shape index: {}]
  %s5 = inlined_call_operand.vmem [shape: f32[1,32], index: 5, kind: input, shape index: {}]
  %s6 = inlined_call_operand.hbm [shape: f32[2,8,32], index: 6, kind: output, shape index: {0}]
  %s7 = inlined_call_operand.hbm [shape: f32[2,4,8,8], index: 7, kind: output, shape index: {1}]
  %8 = xla_tuple %s6, %s7
  %s9 = sld [smem:[#allocation0]]
  $region93: #{tpu_custom_call.1} parent=0
    _
  %s11 = ssub.s32 1, %s9
  %s12 = scalar_select 0, %s11, %s9
  $region1: #{tpu_custom_call.1} parent=0
    #allocation3 [shape = 'u8[8192]{0}', space=vmem, size = 0x2000, scoped, tag = 'input window, operand 0']
    #allocation4 [shape = 's32[2]{0}', space=sflag, size = 0x8, scoped, tag = 'scoped memory for tpu_custom_call.1']
    #allocation5 [shape = 's32[2]{0}', space=sflag, size = 0x8, scoped, tag = 'scoped memory for tpu_custom_call.1']
    #allocation6 [shape = 'u8[16384]{0}', space=vmem, size = 0x4000, scoped, tag = 'input window, operand 1, single buffered']
    #allocation7 [shape = 's32[1]{0}', space=sflag, size = 0x4, scoped, tag = 'scoped memory for tpu_custom_call.1']
    #allocation8 [shape = 'u8[16384]{0}', space=vmem, size = 0x4000, scoped, tag = 'input window, operand 2, single buffered']
    #allocation9 [shape = 'u8[16384]{0}', space=vmem, size = 0x4000, scoped, tag = 'input window, operand 3, single buffered']
    #allocation10 [shape = 's32[1]{0}', space=sflag, size = 0x4, scoped, tag = 'scoped memory for tpu_custom_call.1']
    #allocation11 [shape = 'u8[16384]{0}', space=vmem, size = 0x4000, scoped, tag = 'input window, operand 4, single buffered']
    #allocation12 [shape = 'u8[8192]{0}', space=vmem, size = 0x2000, scoped, tag = 'output window, operand 0']
    #allocation13 [shape = 'u8[32768]{0}', space=vmem, size = 0x8000, scoped, tag = 'output window, operand 1']
    #allocation14 [shape = 's32[2]{0}', space=sflag, size = 0x8, scoped, tag = 'scoped memory for tpu_custom_call.1']
    %13 = vsyncpa [#allocation4], 0
    %s14 = scalar_lea.sflag [#allocation4], 1
    %15 = vsyncpa %s14, 0
    %16 = vsyncpa [#allocation7], 0
    %17 = vsyncpa [#allocation10], 0
    %18 = vsyncpa [#allocation5], 0
    %s19 = scalar_lea.sflag [#allocation5], 1
    %20 = vsyncpa %s19, 0
    %21 = vsyncpa [#allocation14], 0
    %s22 = scalar_lea.sflag [#allocation14], 1
    %23 = vsyncpa %s22, 0
    loop: start=0, step=1, limit=4
    $region2: #{tpu_custom_call.1} parent=1 // loop_pre_header
      _
    $region3: #{tpu_custom_call.1} parent=1 // loop_header
      %s25 = sphi 0, %s29
      %p26 = scmp.ge.s32.totalorder %s25, 4
      %s32 = sphi 0, %s51
      %s33 = sphi 0, %s47
      %s34 = sphi 0, %s43
      %s35 = sphi 0, %s32
      %s36 = sphi 0, %s33
      %s37 = sphi 0, %s34
      %s38 = sphi 0, %s35
      %s39 = sphi 0, %s36
      %s40 = sphi 0, %s37
      %s54 = sphi 0, %s56
      %s57 = sphi 0, %s54
      %s58 = sphi 0, %s57
      %s74 = sphi 0, %s58
      %s80 = sphi 0, %s82
      %s83 = sphi 0, %s80
      %s84 = sphi 0, %s83
      %s100 = sphi 0, %s84
      %s106 = sphi 0, %s108
      %s109 = sphi 0, %s106
      %s110 = sphi 0, %s109
      %s126 = sphi 0, %s110
      %s132 = sphi 0, %s134
      %s135 = sphi 0, %s132
      %s136 = sphi 0, %s135
      %s152 = sphi 0, %s136
      %s158 = sphi 0, %s160
      %s161 = sphi 0, %s158
      %s162 = sphi 0, %s161
      %s178 = sphi 0, %s162
      %s182 = sphi 0, %s182
      %s184 = sphi 0, %s182
      %s185 = sphi 0, %s184
      %s199 = sphi 0, %s185
      %s207 = sphi 0, %s209
      %s210 = sphi 0, %s207
      %s211 = sphi 0, %s210
      %s227 = sphi 0, %s211
      %s237 = sphi 0, %s239
      %s240 = sphi 0, %s237
      %s241 = sphi 0, %s240
      %s257 = sphi 0, %s241
    $region4: #{tpu_custom_call.1} parent=1 // loop_header_branch
      %28 = sbr.rel (%p26) target = $region8
    $region5: #{tpu_custom_call.1} parent=1 // loop_body
      %s30 = ssub.s32 %s25, 1
      %s31 = ssub.s32 %s25, 2
      %s41 = sadd.s32 1, %s34
      %p42 = scmp.ge.s32.totalorder %s41, 1
      %s43 = scalar_select %p42, 0, %s41
      %s44 = sadd.s32 1, %s33
      %s45 = scalar_select %p42, %s44, %s33
      %p46 = scmp.ge.s32.totalorder %s45, 1
      %s47 = scalar_select %p46, 0, %s45
      %s48 = sadd.s32 1, %s32
      %s49 = scalar_select %p46, %s48, %s32
      %p50 = scmp.ge.s32.totalorder %s49, 2
      %s51 = scalar_select %p50, 0, %s49
      %s52 = ssub.s32 %s32, %s51
      %p53 = scmp.eq.s32.totalorder %s52, 0
      %s55 = sadd.s32 %s54, 1
      %s56 = scalar_select %p53, %s54, %s55
      %p59 = pneg %p53
      %p60 = scmp.eq.s32.totalorder %s25, 1
      %p61 = por %p59, %p60
      %p62 = scmp.ne.s32.totalorder %s54, %s57
      %p63 = scmp.eq.s32.totalorder %s25, 0
      %p64 = por %p62, %p63
      %p65 = scmp.ne.s32.totalorder %s54, %s57
      %p66 = scmp.eq.s32.totalorder %s30, 1
      %p67 = por %p65, %p66
      %p68 = scmp.ne.s32.totalorder %s57, %s58
      %p69 = scmp.eq.s32.totalorder %s30, 0
      %p70 = por %p68, %p69
      %p71 = scmp.ne.s32.totalorder %s57, %s58
      %p72 = scmp.eq.s32.totalorder %s31, 1
      %p73 = por %p71, %p72
      %p75 = scmp.ne.s32.totalorder %s58, %s74
      %p76 = scmp.eq.s32.totalorder %s31, 0
      %p77 = por %p75, %p76
      %s78 = ssub.s32 %s34, %s43
      %p79 = scmp.eq.s32.totalorder %s78, 0
      %s81 = sadd.s32 %s80, 1
      %s82 = scalar_select %p79, %s80, %s81
      %p85 = pneg %p79
      %p86 = scmp.eq.s32.totalorder %s25, 1
      %p87 = por %p85, %p86
      %p88 = scmp.ne.s32.totalorder %s80, %s83
      %p89 = scmp.eq.s32.totalorder %s25, 0
      %p90 = por %p88, %p89
      %p91 = scmp.ne.s32.totalorder %s80, %s83
      %p92 = scmp.eq.s32.totalorder %s30, 1
      %p93 = por %p91, %p92
      %p94 = scmp.ne.s32.totalorder %s83, %s84
      %p95 = scmp.eq.s32.totalorder %s30, 0
      %p96 = por %p94, %p95
      %p97 = scmp.ne.s32.totalorder %s83, %s84
      %p98 = scmp.eq.s32.totalorder %s31, 1
      %p99 = por %p97, %p98
      %p101 = scmp.ne.s32.totalorder %s84, %s100
      %p102 = scmp.eq.s32.totalorder %s31, 0
      %p103 = por %p101, %p102
      %s104 = ssub.s32 %s34, %s43
      %p105 = scmp.eq.s32.totalorder %s104, 0
      %s107 = sadd.s32 %s106, 1
      %s108 = scalar_select %p105, %s106, %s107
      %p111 = pneg %p105
      %p112 = scmp.eq.s32.totalorder %s25, 1
      %p113 = por %p111, %p112
      %p114 = scmp.ne.s32.totalorder %s106, %s109
      %p115 = scmp.eq.s32.totalorder %s25, 0
      %p116 = por %p114, %p115
      %p117 = scmp.ne.s32.totalorder %s106, %s109
      %p118 = scmp.eq.s32.totalorder %s30, 1
      %p119 = por %p117, %p118
      %p120 = scmp.ne.s32.totalorder %s109, %s110
      %p121 = scmp.eq.s32.totalorder %s30, 0
      %p122 = por %p120, %p121
      %p123 = scmp.ne.s32.totalorder %s109, %s110
      %p124 = scmp.eq.s32.totalorder %s31, 1
      %p125 = por %p123, %p124
      %p127 = scmp.ne.s32.totalorder %s110, %s126
      %p128 = scmp.eq.s32.totalorder %s31, 0
      %p129 = por %p127, %p128
      %s130 = ssub.s32 %s34, %s43
      %p131 = scmp.eq.s32.totalorder %s130, 0
      %s133 = sadd.s32 %s132, 1
      %s134 = scalar_select %p131, %s132, %s133
      %p137 = pneg %p131
      %p138 = scmp.eq.s32.totalorder %s25, 1
      %p139 = por %p137, %p138
      %p140 = scmp.ne.s32.totalorder %s132, %s135
      %p141 = scmp.eq.s32.totalorder %s25, 0
      %p142 = por %p140, %p141
      %p143 = scmp.ne.s32.totalorder %s132, %s135
      %p144 = scmp.eq.s32.totalorder %s30, 1
      %p145 = por %p143, %p144
      %p146 = scmp.ne.s32.totalorder %s135, %s136
      %p147 = scmp.eq.s32.totalorder %s30, 0
      %p148 = por %p146, %p147
      %p149 = scmp.ne.s32.totalorder %s135, %s136
      %p150 = scmp.eq.s32.totalorder %s31, 1
      %p151 = por %p149, %p150
      %p153 = scmp.ne.s32.totalorder %s136, %s152
      %p154 = scmp.eq.s32.totalorder %s31, 0
      %p155 = por %p153, %p154
      %s156 = ssub.s32 %s34, %s43
      %p157 = scmp.eq.s32.totalorder %s156, 0
      %s159 = sadd.s32 %s158, 1
      %s160 = scalar_select %p157, %s158, %s159
      %p163 = pneg %p157
      %p164 = scmp.eq.s32.totalorder %s25, 1
      %p165 = por %p163, %p164
      %p166 = scmp.ne.s32.totalorder %s158, %s161
      %p167 = scmp.eq.s32.totalorder %s25, 0
      %p168 = por %p166, %p167
      %p169 = scmp.ne.s32.totalorder %s158, %s161
      %p170 = scmp.eq.s32.totalorder %s30, 1
      %p171 = por %p169, %p170
      %p172 = scmp.ne.s32.totalorder %s161, %s162
      %p173 = scmp.eq.s32.totalorder %s30, 0
      %p174 = por %p172, %p173
      %p175 = scmp.ne.s32.totalorder %s161, %s162
      %p176 = scmp.eq.s32.totalorder %s31, 1
      %p177 = por %p175, %p176
      %p179 = scmp.ne.s32.totalorder %s162, %s178
      %p180 = scmp.eq.s32.totalorder %s31, 0
      %p181 = por %p179, %p180
      %s183 = sadd.s32 %s182, 1
      %p186 = scmp.eq.s32.totalorder %s25, 1
      %p187 = scmp.ne.s32.totalorder %s182, %s184
      %p188 = scmp.eq.s32.totalorder %s25, 0
      %p189 = por %p187, %p188
      %p190 = scmp.ne.s32.totalorder %s182, %s184
      %p191 = scmp.eq.s32.totalorder %s30, 1
      %p192 = por %p190, %p191
      %p193 = scmp.ne.s32.totalorder %s184, %s185
      %p194 = scmp.eq.s32.totalorder %s30, 0
      %p195 = por %p193, %p194
      %p196 = scmp.ne.s32.totalorder %s184, %s185
      %p197 = scmp.eq.s32.totalorder %s31, 1
      %p198 = por %p196, %p197
      %p200 = scmp.ne.s32.totalorder %s185, %s199
      %p201 = scmp.eq.s32.totalorder %s31, 0
      %p202 = por %p200, %p201
      %s203 = ssub.s32 %s32, %s51
      %s204 = ssub.s32 %s33, %s47
      %s205 = sor.u32 %s203, %s204
      %p206 = scmp.eq.s32.totalorder %s205, 0
      %s208 = sadd.s32 %s207, 1
      %s209 = scalar_select %p206, %s207, %s208
      %p212 = pneg %p206
      %p213 = scmp.eq.s32.totalorder %s25, 1
      %p214 = por %p212, %p213
      %p215 = scmp.ne.s32.totalorder %s207, %s210
      %p216 = scmp.eq.s32.totalorder %s25, 0
      %p217 = por %p215, %p216
      %p218 = scmp.ne.s32.totalorder %s207, %s210
      %p219 = scmp.eq.s32.totalorder %s30, 1
      %p220 = por %p218, %p219
      %p221 = scmp.ne.s32.totalorder %s210, %s211
      %p222 = scmp.eq.s32.totalorder %s30, 0
      %p223 = por %p221, %p222
      %p224 = scmp.ne.s32.totalorder %s210, %s211
      %p225 = scmp.eq.s32.totalorder %s31, 1
      %p226 = por %p224, %p225
      %p228 = scmp.ne.s32.totalorder %s211, %s227
      %p229 = scmp.eq.s32.totalorder %s31, 0
      %p230 = por %p228, %p229
      %s231 = ssub.s32 %s32, %s51
      %s232 = ssub.s32 %s34, %s43
      %s233 = sor.u32 %s231, %s232
      %s234 = ssub.s32 %s33, %s47
      %s235 = sor.u32 %s233, %s234
      %p236 = scmp.eq.s32.totalorder %s235, 0
      %s238 = sadd.s32 %s237, 1
      %s239 = scalar_select %p236, %s237, %s238
      %p242 = pneg %p236
      %p243 = scmp.eq.s32.totalorder %s25, 1
      %p244 = por %p242, %p243
      %p245 = scmp.ne.s32.totalorder %s237, %s240
      %p246 = scmp.eq.s32.totalorder %s25, 0
      %p247 = por %p245, %p246
      %p248 = scmp.ne.s32.totalorder %s237, %s240
      %p249 = scmp.eq.s32.totalorder %s30, 1
      %p250 = por %p248, %p249
      %p251 = scmp.ne.s32.totalorder %s240, %s241
      %p252 = scmp.eq.s32.totalorder %s30, 0
      %p253 = por %p251, %p252
      %p254 = scmp.ne.s32.totalorder %s240, %s241
      %p255 = scmp.eq.s32.totalorder %s31, 1
      %p256 = por %p254, %p255
      %p258 = scmp.ne.s32.totalorder %s241, %s257
      %p259 = scmp.eq.s32.totalorder %s31, 0
      %p260 = por %p258, %p259
      %p261 = scmp.le.s32.totalorder 1, %s25
      %p262 = scmp.lt.s32.totalorder %s25, 3
      %p263 = pnand %p261, %p262
      %p264 = pneg %p263
      // Predicated region
      $region9: #{tpu_custom_call.1} parent=5 // pred_check
        _
      $region10: #{tpu_custom_call.1} parent=5 // pred_check_branch
        %266 = sbr.rel (%p263) target = $region12
      $region11: #{tpu_custom_call.1} parent=5 // pred_region
        %s267 = ssub.s32 %s25, 1
        // Predicated region
        $region13: #{tpu_custom_call.1} parent=11 // pred_check
          %p268 = pneg %p96
        $region14: #{tpu_custom_call.1} parent=11 // pred_check_branch
          %270 = sbr.rel (%p268) target = $region16
        $region15: #{tpu_custom_call.1} parent=11 // pred_region
          %s272 = ssub.s32 512, 512
          %273 = vsyncadd [#allocation7], %s272
          %s274 = smul.addr %s37, 4
          %s275 = smul.addr %s274, 128
          %s276 = scalar_lea.hbm %s1, %s275
          %s277 = sshll.u32 [#allocation6], 4
          %s278 = int_to_ptr.vmem [resolvable:$true] %s277
          %283 = dma.hbm_to_vmem [thread:$0]  %s276, 512, %s278, [#allocation7], 128, 128, 8
        $region16: #{tpu_custom_call.1} parent=11 // pred_fallthru
          _
        // Predicated region
        $region17: #{tpu_custom_call.1} parent=11 // pred_check
          %p284 = pneg %p122
        $region18: #{tpu_custom_call.1} parent=11 // pred_check_branch
          %286 = sbr.rel (%p284) target = $region20
        $region19: #{tpu_custom_call.1} parent=11 // pred_region
          %s288 = ssub.s32 512, 512
          %289 = vsyncadd [#allocation7], %s288
          %s290 = smul.addr %s37, 4
          %s291 = smul.addr %s290, 128
          %s292 = scalar_lea.hbm %s2, %s291
          %s293 = sshll.u32 [#allocation8], 4
          %s294 = int_to_ptr.vmem [resolvable:$true] %s293
          %299 = dma.hbm_to_vmem [thread:$0]  %s292, 512, %s294, [#allocation7], 128, 128, 8
        $region20: #{tpu_custom_call.1} parent=11 // pred_fallthru
          _
        // Predicated region
        $region21: #{tpu_custom_call.1} parent=11 // pred_check
          %p300 = pneg %p148
        $region22: #{tpu_custom_call.1} parent=11 // pred_check_branch
          %302 = sbr.rel (%p300) target = $region24
        $region23: #{tpu_custom_call.1} parent=11 // pred_region
          %s304 = ssub.s32 512, 512
          %305 = vsyncadd [#allocation10], %s304
          %s306 = smul.addr %s37, 4
          %s307 = smul.addr %s306, 128
          %s308 = scalar_lea.hbm %s3, %s307
          %s309 = sshll.u32 [#allocation9], 4
          %s310 = int_to_ptr.vmem [resolvable:$true] %s309
          %315 = dma.hbm_to_vmem [thread:$0]  %s308, 512, %s310, [#allocation10], 128, 128, 8
        $region24: #{tpu_custom_call.1} parent=11 // pred_fallthru
          _
        // Predicated region
        $region25: #{tpu_custom_call.1} parent=11 // pred_check
          %p316 = pneg %p174
        $region26: #{tpu_custom_call.1} parent=11 // pred_check_branch
          %318 = sbr.rel (%p316) target = $region28
        $region27: #{tpu_custom_call.1} parent=11 // pred_region
          %s320 = ssub.s32 512, 512
          %321 = vsyncadd [#allocation10], %s320
          %s322 = smul.addr %s37, 4
          %s323 = smul.addr %s322, 128
          %s324 = scalar_lea.hbm %s4, %s323
          %s325 = sshll.u32 [#allocation11], 4
          %s326 = int_to_ptr.vmem [resolvable:$true] %s325
          %331 = dma.hbm_to_vmem [thread:$0]  %s324, 512, %s326, [#allocation10], 128, 128, 8
        $region28: #{tpu_custom_call.1} parent=11 // pred_fallthru
          _
        // Predicated region
        $region29: #{tpu_custom_call.1} parent=11 // pred_check
          %p332 = pneg %p195
        $region30: #{tpu_custom_call.1} parent=11 // pred_check_branch
          %334 = sbr.rel (%p332) target = $region32
        $region31: #{tpu_custom_call.1} parent=11 // pred_region
          _
        $region32: #{tpu_custom_call.1} parent=11 // pred_fallthru
          _
      $region12: #{tpu_custom_call.1} parent=5 // pred_fallthru
        _
      %p335 = scmp.lt.s32.totalorder %s25, 2
      // Predicated region
      $region33: #{tpu_custom_call.1} parent=5 // pred_check
        %p336 = pneg %p335
      $region34: #{tpu_custom_call.1} parent=5 // pred_check_branch
        %338 = sbr.rel (%p336) target = $region36
      $region35: #{tpu_custom_call.1} parent=5 // pred_region
        // Predicated region
        $region37: #{tpu_custom_call.1} parent=35 // pred_check
          %p339 = pneg %p64
        $region38: #{tpu_custom_call.1} parent=35 // pred_check_branch
          %341 = sbr.rel (%p339) target = $region40
        $region39: #{tpu_custom_call.1} parent=35 // pred_region
          %s342 = sand.u32 %s54, 1
          %s343 = scalar_lea.sflag [#allocation4], %s342
          %s344 = sand.u32 %s54, 1
          %s345 = smul.addr %s344, 8
          %s346 = scalar_lea.vmem [#allocation3], %s345
          %s348 = ssub.s32 128, 128
          %349 = vsyncadd %s343, %s348
          %s350 = smul.addr %s32, 128
          %s351 = scalar_lea.hbm %s0, %s350
          %s353 = sshll.u32 %s346, 4
          %s354 = int_to_ptr.vmem [resolvable:$true] %s353
          %356 = dma.hbm_to_vmem [thread:$0]  %s351, 128, %s354, %s343
        $region40: #{tpu_custom_call.1} parent=35 // pred_fallthru
          _
      $region36: #{tpu_custom_call.1} parent=5 // pred_fallthru
        _
      %p357 = scmp.le.s32.totalorder 1, %s25
      %p358 = scmp.lt.s32.totalorder %s25, 3
      %p359 = pnand %p357, %p358
      %p360 = pneg %p359
      // Predicated region
      $region41: #{tpu_custom_call.1} parent=5 // pred_check
        _
      $region42: #{tpu_custom_call.1} parent=5 // pred_check_branch
        %362 = sbr.rel (%p359) target = $region44
      $region43: #{tpu_custom_call.1} parent=5 // pred_region
        %s363 = ssub.s32 %s25, 1
        %s364 = sand.u32 %s57, 1
        %s365 = scalar_lea.sflag [#allocation4], %s364
        %s366 = sand.u32 %s57, 1
        %s367 = smul.addr %s366, 8
        %s368 = scalar_lea.vmem [#allocation3], %s367
        // Predicated region
        $region45: #{tpu_custom_call.1} parent=43 // pred_check
          %p369 = pneg %p70
        $region46: #{tpu_custom_call.1} parent=43 // pred_check_branch
          %371 = sbr.rel (%p369) target = $region48
        $region47: #{tpu_custom_call.1} parent=43 // pred_region
          %372 = dma.done %s365, 128
        $region48: #{tpu_custom_call.1} parent=43 // pred_fallthru
          _
        // Predicated region
        $region49: #{tpu_custom_call.1} parent=43 // pred_check
          %p373 = pneg %p96
        $region50: #{tpu_custom_call.1} parent=43 // pred_check_branch
          %375 = sbr.rel (%p373) target = $region52
        $region51: #{tpu_custom_call.1} parent=43 // pred_region
          %376 = dma.done [#allocation7], 512
        $region52: #{tpu_custom_call.1} parent=43 // pred_fallthru
          _
        // Predicated region
        $region53: #{tpu_custom_call.1} parent=43 // pred_check
          %p377 = pneg %p122
        $region54: #{tpu_custom_call.1} parent=43 // pred_check_branch
          %379 = sbr.rel (%p377) target = $region56
        $region55: #{tpu_custom_call.1} parent=43 // pred_region
          %380 = dma.done [#allocation7], 512
        $region56: #{tpu_custom_call.1} parent=43 // pred_fallthru
          _
        // Predicated region
        $region57: #{tpu_custom_call.1} parent=43 // pred_check
          %p381 = pneg %p148
        $region58: #{tpu_custom_call.1} parent=43 // pred_check_branch
          %383 = sbr.rel (%p381) target = $region60
        $region59: #{tpu_custom_call.1} parent=43 // pred_region
          %384 = dma.done [#allocation10], 512
        $region60: #{tpu_custom_call.1} parent=43 // pred_fallthru
          _
        // Predicated region
        $region61: #{tpu_custom_call.1} parent=43 // pred_check
          %p385 = pneg %p174
        $region62: #{tpu_custom_call.1} parent=43 // pred_check_branch
          %387 = sbr.rel (%p385) target = $region64
        $region63: #{tpu_custom_call.1} parent=43 // pred_region
          %388 = dma.done [#allocation10], 512
        $region64: #{tpu_custom_call.1} parent=43 // pred_fallthru
          _
        %s389 = sand.u32 %s57, 1
        %s390 = scalar_lea.sflag [#allocation4], %s389
        %s391 = sand.u32 %s57, 1
        %s392 = smul.addr %s391, 8
        %s393 = scalar_lea.vmem [#allocation3], %s392
        %p394 = pneg %p70
        %p395 = pneg %p67
        %p396 = pneg %p96
        %p397 = pneg %p93
        %p398 = pneg %p122
        %p399 = pneg %p119
        %p400 = pneg %p148
        %p401 = pneg %p145
        %p402 = pneg %p174
        %p403 = pneg %p171
        %p404 = pneg %p195
        %p405 = pneg %p192
        %p406 = pneg %p223
        %p407 = pneg %p220
        %s408 = sand.u32 %s210, 1
        %s409 = scalar_lea.sflag [#allocation5], %s408
        %s410 = sand.u32 %s210, 1
        %s411 = smul.addr %s410, 8
        %s412 = scalar_lea.vmem [#allocation12], %s411
        %p413 = pneg %p253
        %p414 = pneg %p250
        %s415 = sand.u32 %s240, 1
        %s416 = scalar_lea.sflag [#allocation14], %s415
        %s417 = sand.u32 %s240, 1
        %s418 = smul.addr %s417, 32
        %s419 = scalar_lea.vmem [#allocation13], %s418
        %s420 = smul.u32 4, %s37
        %s421 = smul.u32 %s36, 8
        %v422 = vld [vmem:[%s368] sm:$0xff]
        %s423 = scalar_lea.vmem %s368, %s421 [#allocation3]
        %v424 = vld [vmem:[%s423] sm:$0xff]
        %v425 = vld [vmem:[#allocation6] sm:$0xff]
        %v426 = vld [vmem:[#allocation6 + $0x8] sm:$0xff]
        %v427 = vld [vmem:[#allocation6 + $0x10] sm:$0xff]
        %v428 = vld [vmem:[#allocation6 + $0x18] sm:$0xff]
        %vm429 = vcmask 261120
        %v431 = vsel %vm429, %v424, 0
        %433 = vmatprep.subr.mxu0 0.0
        %434 = vmatpush1.msra.mxu0 %v425
        %435 = vmatprep.subr.mxu0 0.0
        %436 = vmatpush1.msra.mxu0 %v426
        %437 = vmatprep.subr.mxu0 0.0
        %438 = vmatpush1.msra.mxu0 %v427
        %439 = vmatprep.subr.mxu0 0.0
        %440 = vmatpush1.msra.mxu0 %v428
        %441 = vmatprep.subr.mxu0 0.0
        %442 = vmatpush1.msra.mxu0 0.0
        %443 = vmatprep.subr.mxu0 0.0
        %444 = vmatpush1.msra.mxu0 0.0
        %445 = vmatprep.subr.mxu0 0.0
        %446 = vmatpush1.msra.mxu0 0.0
        %447 = vmatprep.subr.mxu0 0.0
        %448 = vmatpush1.msra.mxu0 0.0
        %449 = vmatprep.subr.mxu0 0.0
        %450 = vmatpush1.msra.mxu0 0.0
        %451 = vmatprep.subr.mxu0 0.0
        %452 = vmatpush1.msra.mxu0 0.0
        %453 = vmatprep.subr.mxu0 0.0
        %454 = vmatpush1.msra.mxu0 0.0
        %455 = vmatprep.subr.mxu0 0.0
        %456 = vmatpush1.msra.mxu0 0.0
        %457 = vmatprep.subr.mxu0 0.0
        %458 = vmatpush1.msra.mxu0 0.0
        %459 = vmatprep.subr.mxu0 0.0
        %460 = vmatpush1.msra.mxu0 0.0
        %461 = vmatprep.subr.mxu0 0.0
        %462 = vmatpush1.msra.mxu0 0.0
        %463 = vmatprep.subr.mxu0 0.0
        %464 = vmatpush1.msra.mxu0 0.0
        %465 = vmatprep.subr.mxu0 0.0
        %466 = vmatpush1.msra.mxu0 0.0
        %467 = vmatprep.subr.mxu0 0.0
        %468 = vmatpush1.msra.mxu0 0.0
        %469 = vmatprep.subr.mxu0 0.0
        %470 = vmatpush1.msra.mxu0 0.0
        %471 = vmatprep.subr.mxu0 0.0
        %472 = vmatpush1.msra.mxu0 0.0
        %473 = vmatprep.subr.mxu0 0.0
        %474 = vmatpush1.msra.mxu0 0.0
        %475 = vmatprep.subr.mxu0 0.0
        %476 = vmatpush1.msra.mxu0 0.0
        %477 = vmatprep.subr.mxu0 0.0
        %478 = vmatpush1.msra.mxu0 0.0
        %479 = vmatprep.subr.mxu0 0.0
        %480 = vmatpush1.msra.mxu0 0.0
        %481 = vmatprep.subr.mxu0 0.0
        %482 = vmatpush1.msra.mxu0 0.0
        %483 = vmatprep.subr.mxu0 0.0
        %484 = vmatpush1.msra.mxu0 0.0
        %485 = vmatprep.subr.mxu0 0.0
        %486 = vmatpush1.msra.mxu0 0.0
        %487 = vmatprep.subr.mxu0 0.0
        %488 = vmatpush1.msra.mxu0 0.0
        %489 = vmatprep.subr.mxu0 0.0
        %490 = vmatpush1.msra.mxu0 0.0
        %491 = vmatprep.subr.mxu0 0.0
        %492 = vmatpush1.msra.mxu0 0.0
        %493 = vmatprep.subr.mxu0 0.0
        %494 = vmatpush1.msra.mxu0 0.0
        %495 = vmatprep.subr.mxu0 0.0
        %496 = vmatpush1.msra.mxu0 0.0
        %497 = vmatprep.mubr.f32.mxu0 0.0
        %498 = vmatmul.mubr.f32.gmra.mrb[0].mxu0 %v431
        %v499 = vpop.f32.mrb[0].mxu0
        %v500 = vadd.f32 0.0, %v499
        %v501 = vpop.f32.mrb[0].mxu0
        %502 = vdwg.mxu0
        %v503 = vld [vmem:[#allocation8] sm:$0xff]
        %v504 = vld [vmem:[#allocation8 + $0x8] sm:$0xff]
        %v505 = vld [vmem:[#allocation8 + $0x10] sm:$0xff]
        %v506 = vld [vmem:[#allocation8 + $0x18] sm:$0xff]
        %v508 = vsel %vm429, %v422, 0
        %510 = vmatprep.subr.mxu0 0.0
        %511 = vmatpush1.msra.mxu0 %v503
        %512 = vmatprep.subr.mxu0 0.0
        %513 = vmatpush1.msra.mxu0 %v504
        %514 = vmatprep.subr.mxu0 0.0
        %515 = vmatpush1.msra.mxu0 %v505
        %516 = vmatprep.subr.mxu0 0.0
        %517 = vmatpush1.msra.mxu0 %v506
        %518 = vmatprep.subr.mxu0 0.0
        %519 = vmatpush1.msra.mxu0 0.0
        %520 = vmatprep.subr.mxu0 0.0
        %521 = vmatpush1.msra.mxu0 0.0
        %522 = vmatprep.subr.mxu0 0.0
        %523 = vmatpush1.msra.mxu0 0.0
        %524 = vmatprep.subr.mxu0 0.0
        %525 = vmatpush1.msra.mxu0 0.0
        %526 = vmatprep.subr.mxu0 0.0
        %527 = vmatpush1.msra.mxu0 0.0
        %528 = vmatprep.subr.mxu0 0.0
        %529 = vmatpush1.msra.mxu0 0.0
        %530 = vmatprep.subr.mxu0 0.0
        %531 = vmatpush1.msra.mxu0 0.0
        %532 = vmatprep.subr.mxu0 0.0
        %533 = vmatpush1.msra.mxu0 0.0
        %534 = vmatprep.subr.mxu0 0.0
        %535 = vmatpush1.msra.mxu0 0.0
        %536 = vmatprep.subr.mxu0 0.0
        %537 = vmatpush1.msra.mxu0 0.0
        %538 = vmatprep.subr.mxu0 0.0
        %539 = vmatpush1.msra.mxu0 0.0
        %540 = vmatprep.subr.mxu0 0.0
        %541 = vmatpush1.msra.mxu0 0.0
        %542 = vmatprep.subr.mxu0 0.0
        %543 = vmatpush1.msra.mxu0 0.0
        %544 = vmatprep.subr.mxu0 0.0
        %545 = vmatpush1.msra.mxu0 0.0
        %546 = vmatprep.subr.mxu0 0.0
        %547 = vmatpush1.msra.mxu0 0.0
        %548 = vmatprep.subr.mxu0 0.0
        %549 = vmatpush1.msra.mxu0 0.0
        %550 = vmatprep.subr.mxu0 0.0
        %551 = vmatpush1.msra.mxu0 0.0
        %552 = vmatprep.subr.mxu0 0.0
        %553 = vmatpush1.msra.mxu0 0.0
        %554 = vmatprep.subr.mxu0 0.0
        %555 = vmatpush1.msra.mxu0 0.0
        %556 = vmatprep.subr.mxu0 0.0
        %557 = vmatpush1.msra.mxu0 0.0
        %558 = vmatprep.subr.mxu0 0.0
        %559 = vmatpush1.msra.mxu0 0.0
        %560 = vmatprep.subr.mxu0 0.0
        %561 = vmatpush1.msra.mxu0 0.0
        %562 = vmatprep.subr.mxu0 0.0
        %563 = vmatpush1.msra.mxu0 0.0
        %564 = vmatprep.subr.mxu0 0.0
        %565 = vmatpush1.msra.mxu0 0.0
        %566 = vmatprep.subr.mxu0 0.0
        %567 = vmatpush1.msra.mxu0 0.0
        %568 = vmatprep.subr.mxu0 0.0
        %569 = vmatpush1.msra.mxu0 0.0
        %570 = vmatprep.subr.mxu0 0.0
        %571 = vmatpush1.msra.mxu0 0.0
        %572 = vmatprep.subr.mxu0 0.0
        %573 = vmatpush1.msra.mxu0 0.0
        %574 = vmatprep.mubr.f32.mxu0 0.0
        %575 = vmatmul.mubr.f32.gmra.mrb[0].mxu0 %v508
        %v576 = vpop.f32.mrb[0].mxu0
        %v577 = vadd.f32 0.0, %v576
        %v578 = vpop.f32.mrb[0].mxu0
        %579 = vdwg.mxu0
        %v580 = vld [vmem:[#allocation9] sm:$0xff]
        %v581 = vld [vmem:[#allocation9 + $0x8] sm:$0xff]
        %v582 = vld [vmem:[#allocation9 + $0x10] sm:$0xff]
        %v583 = vld [vmem:[#allocation9 + $0x18] sm:$0xff]
        %584 = vmatprep.subr.mxu0 0.0
        %585 = vmatpush1.msra.mxu0 %v580
        %586 = vmatprep.subr.mxu0 0.0
        %587 = vmatpush1.msra.mxu0 %v581
        %588 = vmatprep.subr.mxu0 0.0
        %589 = vmatpush1.msra.mxu0 %v582
        %590 = vmatprep.subr.mxu0 0.0
        %591 = vmatpush1.msra.mxu0 %v583
        %592 = vmatprep.subr.mxu0 0.0
        %593 = vmatpush1.msra.mxu0 0.0
        %594 = vmatprep.subr.mxu0 0.0
        %595 = vmatpush1.msra.mxu0 0.0
        %596 = vmatprep.subr.mxu0 0.0
        %597 = vmatpush1.msra.mxu0 0.0
        %598 = vmatprep.subr.mxu0 0.0
        %599 = vmatpush1.msra.mxu0 0.0
        %600 = vmatprep.subr.mxu0 0.0
        %601 = vmatpush1.msra.mxu0 0.0
        %602 = vmatprep.subr.mxu0 0.0
        %603 = vmatpush1.msra.mxu0 0.0
        %604 = vmatprep.subr.mxu0 0.0
        %605 = vmatpush1.msra.mxu0 0.0
        %606 = vmatprep.subr.mxu0 0.0
        %607 = vmatpush1.msra.mxu0 0.0
        %608 = vmatprep.subr.mxu0 0.0
        %609 = vmatpush1.msra.mxu0 0.0
        %610 = vmatprep.subr.mxu0 0.0
        %611 = vmatpush1.msra.mxu0 0.0
        %612 = vmatprep.subr.mxu0 0.0
        %613 = vmatpush1.msra.mxu0 0.0
        %614 = vmatprep.subr.mxu0 0.0
        %615 = vmatpush1.msra.mxu0 0.0
        %616 = vmatprep.subr.mxu0 0.0
        %617 = vmatpush1.msra.mxu0 0.0
        %618 = vmatprep.subr.mxu0 0.0
        %619 = vmatpush1.msra.mxu0 0.0
        %620 = vmatprep.subr.mxu0 0.0
        %621 = vmatpush1.msra.mxu0 0.0
        %622 = vmatprep.subr.mxu0 0.0
        %623 = vmatpush1.msra.mxu0 0.0
        %624 = vmatprep.subr.mxu0 0.0
        %625 = vmatpush1.msra.mxu0 0.0
        %626 = vmatprep.subr.mxu0 0.0
        %627 = vmatpush1.msra.mxu0 0.0
        %628 = vmatprep.subr.mxu0 0.0
        %629 = vmatpush1.msra.mxu0 0.0
        %630 = vmatprep.subr.mxu0 0.0
        %631 = vmatpush1.msra.mxu0 0.0
        %632 = vmatprep.subr.mxu0 0.0
        %633 = vmatpush1.msra.mxu0 0.0
        %634 = vmatprep.subr.mxu0 0.0
        %635 = vmatpush1.msra.mxu0 0.0
        %636 = vmatprep.subr.mxu0 0.0
        %637 = vmatpush1.msra.mxu0 0.0
        %638 = vmatprep.subr.mxu0 0.0
        %639 = vmatpush1.msra.mxu0 0.0
        %640 = vmatprep.subr.mxu0 0.0
        %641 = vmatpush1.msra.mxu0 0.0
        %642 = vmatprep.subr.mxu0 0.0
        %643 = vmatpush1.msra.mxu0 0.0
        %644 = vmatprep.subr.mxu0 0.0
        %645 = vmatpush1.msra.mxu0 0.0
        %646 = vmatprep.subr.mxu0 0.0
        %647 = vmatpush1.msra.mxu0 0.0
        %648 = vmatprep.mubr.f32.mxu0 0.0
        %649 = vmatmul.mubr.f32.gmra.mrb[0].mxu0 %v508
        %v650 = vpop.f32.mrb[0].mxu0
        %v651 = vadd.f32 0.0, %v650
        %v652 = vpop.f32.mrb[0].mxu0
        %653 = vdwg.mxu0
        %655 = vrot.lane.b32.xlu0 %v500, 120
        %v656 = vpop.permute.xlu0 %655
        %658 = vrot.lane.b32.xlu0 %v500, 112
        %v659 = vpop.permute.xlu0 %658
        %661 = vrot.lane.b32.xlu0 %v500, 104
        %v662 = vpop.permute.xlu0 %661
        %v664 = vcombine.low %v500, %v659
        %v665 = vcombine.high %v500, %v659
        %v667 = vunpack.c.l.s4 1983009808
        %v668 = vunpack.c.0.s8 %v667
        %v669 = vlaneseq
        %v670 = vshrl.u32 %v669, 7
        %v671 = vsub.s32 %v668, %v670
        %v672 = vrot.slane %v664, %v671
        %v674 = vunpack.c.l.s4 1983009808
        %v675 = vunpack.c.0.s8 %v674
        %v676 = vlaneseq
        %v677 = vshrl.u32 %v676, 7
        %v678 = vsub.s32 %v675, %v677
        %v679 = vrot.slane %v665, %v678
        %v680 = vcombine.low %v656, %v662
        %v681 = vcombine.high %v656, %v662
        %v683 = vunpack.c.l.s4 1983009808
        %v684 = vunpack.c.0.s8 %v683
        %v685 = vlaneseq
        %v686 = vshrl.u32 %v685, 7
        %v687 = vsub.s32 %v684, %v686
        %v688 = vrot.slane %v680, %v687
        %v690 = vunpack.c.l.s4 1983009808
        %v691 = vunpack.c.0.s8 %v690
        %v692 = vlaneseq
        %v693 = vshrl.u32 %v692, 7
        %v694 = vsub.s32 %v691, %v693
        %v695 = vrot.slane %v681, %v694
        %v696 = vcombine.low %v672, %v688
        %v697 = vcombine.high %v672, %v688
        %v699 = vunpack.c.l.s4 1934713408
        %v700 = vunpack.c.0.s8 %v699
        %v701 = vlaneseq
        %v702 = vshrl.u32 %v701, 7
        %v703 = vsub.s32 %v700, %v702
        %v704 = vrot.slane %v696, %v703
        %v706 = vunpack.c.l.s4 1934713408
        %v707 = vunpack.c.0.s8 %v706
        %v708 = vlaneseq
        %v709 = vshrl.u32 %v708, 7
        %v710 = vsub.s32 %v707, %v709
        %v711 = vrot.slane %v697, %v710
        %v712 = vcombine.low %v679, %v695
        %v713 = vcombine.high %v679, %v695
        %v715 = vunpack.c.l.s4 1934713408
        %v716 = vunpack.c.0.s8 %v715
        %v717 = vlaneseq
        %v718 = vshrl.u32 %v717, 7
        %v719 = vsub.s32 %v716, %v718
        %v720 = vrot.slane %v712, %v719
        %v722 = vunpack.c.l.s4 1934713408
        %v723 = vunpack.c.0.s8 %v722
        %v724 = vlaneseq
        %v725 = vshrl.u32 %v724, 7
        %v726 = vsub.s32 %v723, %v725
        %v727 = vrot.slane %v713, %v726
        %v728 = vcombine.high %v704, 0.0
        %v729 = vcombine.high %v711, 0.0
        %v730 = vcombine.high %v720, 0.0
        %v731 = vcombine.high %v727, 0.0
        %v732 = vcombine.low %v704, %v711
        %v734 = vunpack.c.l.s4 1983009808
        %v735 = vunpack.c.0.s8 %v734
        %v736 = vlaneseq
        %v737 = vshrl.u32 %v736, 7
        %v738 = vsub.s32 %v735, %v737
        %v739 = vrot.slane %v732, %v738
        %v740 = vcombine.low %v728, %v729
        %v742 = vunpack.c.l.s4 1983009808
        %v743 = vunpack.c.0.s8 %v742
        %v744 = vlaneseq
        %v745 = vshrl.u32 %v744, 7
        %v746 = vsub.s32 %v743, %v745
        %v747 = vrot.slane %v740, %v746
        %v748 = vcombine.low %v720, %v727
        %v750 = vunpack.c.l.s4 1983009808
        %v751 = vunpack.c.0.s8 %v750
        %v752 = vlaneseq
        %v753 = vshrl.u32 %v752, 7
        %v754 = vsub.s32 %v751, %v753
        %v755 = vrot.slane %v748, %v754
        %v756 = vcombine.low %v730, %v731
        %v758 = vunpack.c.l.s4 1983009808
        %v759 = vunpack.c.0.s8 %v758
        %v760 = vlaneseq
        %v761 = vshrl.u32 %v760, 7
        %v762 = vsub.s32 %v759, %v761
        %v763 = vrot.slane %v756, %v762
        %v764 = vcombine.low %v739, %v747
        %v765 = vcombine.high %v739, %v747
        %v767 = vunpack.c.l.s4 1934713408
        %v768 = vunpack.c.0.s8 %v767
        %v769 = vlaneseq
        %v770 = vshrl.u32 %v769, 7
        %v771 = vsub.s32 %v768, %v770
        %v772 = vrot.slane %v764, %v771
        %v774 = vunpack.c.l.s4 1934713408
        %v775 = vunpack.c.0.s8 %v774
        %v776 = vlaneseq
        %v777 = vshrl.u32 %v776, 7
        %v778 = vsub.s32 %v775, %v777
        %v779 = vrot.slane %v765, %v778
        %v780 = vcombine.low %v755, %v763
        %v781 = vcombine.high %v755, %v763
        %v783 = vunpack.c.l.s4 1934713408
        %v784 = vunpack.c.0.s8 %v783
        %v785 = vlaneseq
        %v786 = vshrl.u32 %v785, 7
        %v787 = vsub.s32 %v784, %v786
        %v788 = vrot.slane %v780, %v787
        %v790 = vunpack.c.l.s4 1934713408
        %v791 = vunpack.c.0.s8 %v790
        %v792 = vlaneseq
        %v793 = vshrl.u32 %v792, 7
        %v794 = vsub.s32 %v791, %v793
        %v795 = vrot.slane %v781, %v794
        %v796 = vcombine.low %v772, %v788
        %v797 = vcombine.high %v772, %v788
        %v798 = vcombine.low %v779, %v795
        %v799 = vcombine.high %v779, %v795
        %801 = vrot.lane.b32.xlu0 %v577, 120
        %v802 = vpop.permute.xlu0 %801
        %804 = vrot.lane.b32.xlu0 %v577, 112
        %v805 = vpop.permute.xlu0 %804
        %807 = vrot.lane.b32.xlu0 %v577, 104
        %v808 = vpop.permute.xlu0 %807
        %v810 = vcombine.low %v577, %v805
        %v811 = vcombine.high %v577, %v805
        %v813 = vunpack.c.l.s4 1983009808
        %v814 = vunpack.c.0.s8 %v813
        %v815 = vlaneseq
        %v816 = vshrl.u32 %v815, 7
        %v817 = vsub.s32 %v814, %v816
        %v818 = vrot.slane %v810, %v817
        %v820 = vunpack.c.l.s4 1983009808
        %v821 = vunpack.c.0.s8 %v820
        %v822 = vlaneseq
        %v823 = vshrl.u32 %v822, 7
        %v824 = vsub.s32 %v821, %v823
        %v825 = vrot.slane %v811, %v824
        %v826 = vcombine.low %v802, %v808
        %v827 = vcombine.high %v802, %v808
        %v829 = vunpack.c.l.s4 1983009808
        %v830 = vunpack.c.0.s8 %v829
        %v831 = vlaneseq
        %v832 = vshrl.u32 %v831, 7
        %v833 = vsub.s32 %v830, %v832
        %v834 = vrot.slane %v826, %v833
        %v836 = vunpack.c.l.s4 1983009808
        %v837 = vunpack.c.0.s8 %v836
        %v838 = vlaneseq
        %v839 = vshrl.u32 %v838, 7
        %v840 = vsub.s32 %v837, %v839
        %v841 = vrot.slane %v827, %v840
        %v842 = vcombine.low %v818, %v834
        %v843 = vcombine.high %v818, %v834
        %v845 = vunpack.c.l.s4 1934713408
        %v846 = vunpack.c.0.s8 %v845
        %v847 = vlaneseq
        %v848 = vshrl.u32 %v847, 7
        %v849 = vsub.s32 %v846, %v848
        %v850 = vrot.slane %v842, %v849
        %v852 = vunpack.c.l.s4 1934713408
        %v853 = vunpack.c.0.s8 %v852
        %v854 = vlaneseq
        %v855 = vshrl.u32 %v854, 7
        %v856 = vsub.s32 %v853, %v855
        %v857 = vrot.slane %v843, %v856
        %v858 = vcombine.low %v825, %v841
        %v859 = vcombine.high %v825, %v841
        %v861 = vunpack.c.l.s4 1934713408
        %v862 = vunpack.c.0.s8 %v861
        %v863 = vlaneseq
        %v864 = vshrl.u32 %v863, 7
        %v865 = vsub.s32 %v862, %v864
        %v866 = vrot.slane %v858, %v865
        %v868 = vunpack.c.l.s4 1934713408
        %v869 = vunpack.c.0.s8 %v868
        %v870 = vlaneseq
        %v871 = vshrl.u32 %v870, 7
        %v872 = vsub.s32 %v869, %v871
        %v873 = vrot.slane %v859, %v872
        %v874 = vcombine.high %v850, 0.0
        %v875 = vcombine.high %v857, 0.0
        %v876 = vcombine.high %v866, 0.0
        %v877 = vcombine.high %v873, 0.0
        %v878 = vcombine.low %v850, %v857
        %v880 = vunpack.c.l.s4 1983009808
        %v881 = vunpack.c.0.s8 %v880
        %v882 = vlaneseq
        %v883 = vshrl.u32 %v882, 7
        %v884 = vsub.s32 %v881, %v883
        %v885 = vrot.slane %v878, %v884
        %v886 = vcombine.low %v874, %v875
        %v888 = vunpack.c.l.s4 1983009808
        %v889 = vunpack.c.0.s8 %v888
        %v890 = vlaneseq
        %v891 = vshrl.u32 %v890, 7
        %v892 = vsub.s32 %v889, %v891
        %v893 = vrot.slane %v886, %v892
        %v894 = vcombine.low %v866, %v873
        %v896 = vunpack.c.l.s4 1983009808
        %v897 = vunpack.c.0.s8 %v896
        %v898 = vlaneseq
        %v899 = vshrl.u32 %v898, 7
        %v900 = vsub.s32 %v897, %v899
        %v901 = vrot.slane %v894, %v900
        %v902 = vcombine.low %v876, %v877
        %v904 = vunpack.c.l.s4 1983009808
        %v905 = vunpack.c.0.s8 %v904
        %v906 = vlaneseq
        %v907 = vshrl.u32 %v906, 7
        %v908 = vsub.s32 %v905, %v907
        %v909 = vrot.slane %v902, %v908
        %v910 = vcombine.low %v885, %v893
        %v911 = vcombine.high %v885, %v893
        %v913 = vunpack.c.l.s4 1934713408
        %v914 = vunpack.c.0.s8 %v913
        %v915 = vlaneseq
        %v916 = vshrl.u32 %v915, 7
        %v917 = vsub.s32 %v914, %v916
        %v918 = vrot.slane %v910, %v917
        %v920 = vunpack.c.l.s4 1934713408
        %v921 = vunpack.c.0.s8 %v920
        %v922 = vlaneseq
        %v923 = vshrl.u32 %v922, 7
        %v924 = vsub.s32 %v921, %v923
        %v925 = vrot.slane %v911, %v924
        %v926 = vcombine.low %v901, %v909
        %v927 = vcombine.high %v901, %v909
        %v929 = vunpack.c.l.s4 1934713408
        %v930 = vunpack.c.0.s8 %v929
        %v931 = vlaneseq
        %v932 = vshrl.u32 %v931, 7
        %v933 = vsub.s32 %v930, %v932
        %v934 = vrot.slane %v926, %v933
        %v936 = vunpack.c.l.s4 1934713408
        %v937 = vunpack.c.0.s8 %v936
        %v938 = vlaneseq
        %v939 = vshrl.u32 %v938, 7
        %v940 = vsub.s32 %v937, %v939
        %v941 = vrot.slane %v927, %v940
        %v942 = vcombine.low %v918, %v934
        %v943 = vcombine.high %v918, %v934
        %v944 = vcombine.low %v925, %v941
        %v945 = vcombine.high %v925, %v941
        %947 = vrot.lane.b32.xlu0 %v651, 120
        %v948 = vpop.permute.xlu0 %947
        %950 = vrot.lane.b32.xlu0 %v651, 112
        %v951 = vpop.permute.xlu0 %950
        %953 = vrot.lane.b32.xlu0 %v651, 104
        %v954 = vpop.permute.xlu0 %953
        %v956 = vcombine.low %v651, %v951
        %v957 = vcombine.high %v651, %v951
        %v959 = vunpack.c.l.s4 1983009808
        %v960 = vunpack.c.0.s8 %v959
        %v961 = vlaneseq
        %v962 = vshrl.u32 %v961, 7
        %v963 = vsub.s32 %v960, %v962
        %v964 = vrot.slane %v956, %v963
        %v966 = vunpack.c.l.s4 1983009808
        %v967 = vunpack.c.0.s8 %v966
        %v968 = vlaneseq
        %v969 = vshrl.u32 %v968, 7
        %v970 = vsub.s32 %v967, %v969
        %v971 = vrot.slane %v957, %v970
        %v972 = vcombine.low %v948, %v954
        %v973 = vcombine.high %v948, %v954
        %v975 = vunpack.c.l.s4 1983009808
        %v976 = vunpack.c.0.s8 %v975
        %v977 = vlaneseq
        %v978 = vshrl.u32 %v977, 7
        %v979 = vsub.s32 %v976, %v978
        %v980 = vrot.slane %v972, %v979
        %v982 = vunpack.c.l.s4 1983009808
        %v983 = vunpack.c.0.s8 %v982
        %v984 = vlaneseq
        %v985 = vshrl.u32 %v984, 7
        %v986 = vsub.s32 %v983, %v985
        %v987 = vrot.slane %v973, %v986
        %v988 = vcombine.low %v964, %v980
        %v989 = vcombine.high %v964, %v980
        %v991 = vunpack.c.l.s4 1934713408
        %v992 = vunpack.c.0.s8 %v991
        %v993 = vlaneseq
        %v994 = vshrl.u32 %v993, 7
        %v995 = vsub.s32 %v992, %v994
        %v996 = vrot.slane %v988, %v995
        %v998 = vunpack.c.l.s4 1934713408
        %v999 = vunpack.c.0.s8 %v998
        %v1000 = vlaneseq
        %v1001 = vshrl.u32 %v1000, 7
        %v1002 = vsub.s32 %v999, %v1001
        %v1003 = vrot.slane %v989, %v1002
        %v1004 = vcombine.low %v971, %v987
        %v1005 = vcombine.high %v971, %v987
        %v1007 = vunpack.c.l.s4 1934713408
        %v1008 = vunpack.c.0.s8 %v1007
        %v1009 = vlaneseq
        %v1010 = vshrl.u32 %v1009, 7
        %v1011 = vsub.s32 %v1008, %v1010
        %v1012 = vrot.slane %v1004, %v1011
        %v1014 = vunpack.c.l.s4 1934713408
        %v1015 = vunpack.c.0.s8 %v1014
        %v1016 = vlaneseq
        %v1017 = vshrl.u32 %v1016, 7
        %v1018 = vsub.s32 %v1015, %v1017
        %v1019 = vrot.slane %v1005, %v1018
        %v1020 = vcombine.high %v996, 0.0
        %v1021 = vcombine.high %v1003, 0.0
        %v1022 = vcombine.high %v1012, 0.0
        %v1023 = vcombine.high %v1019, 0.0
        %v1024 = vcombine.low %v996, %v1003
        %v1026 = vunpack.c.l.s4 1983009808
        %v1027 = vunpack.c.0.s8 %v1026
        %v1028 = vlaneseq
        %v1029 = vshrl.u32 %v1028, 7
        %v1030 = vsub.s32 %v1027, %v1029
        %v1031 = vrot.slane %v1024, %v1030
        %v1032 = vcombine.low %v1020, %v1021
        %v1034 = vunpack.c.l.s4 1983009808
        %v1035 = vunpack.c.0.s8 %v1034
        %v1036 = vlaneseq
        %v1037 = vshrl.u32 %v1036, 7
        %v1038 = vsub.s32 %v1035, %v1037
        %v1039 = vrot.slane %v1032, %v1038
        %v1040 = vcombine.low %v1012, %v1019
        %v1042 = vunpack.c.l.s4 1983009808
        %v1043 = vunpack.c.0.s8 %v1042
        %v1044 = vlaneseq
        %v1045 = vshrl.u32 %v1044, 7
        %v1046 = vsub.s32 %v1043, %v1045
        %v1047 = vrot.slane %v1040, %v1046
        %v1048 = vcombine.low %v1022, %v1023
        %v1050 = vunpack.c.l.s4 1983009808
        %v1051 = vunpack.c.0.s8 %v1050
        %v1052 = vlaneseq
        %v1053 = vshrl.u32 %v1052, 7
        %v1054 = vsub.s32 %v1051, %v1053
        %v1055 = vrot.slane %v1048, %v1054
        %v1056 = vcombine.low %v1031, %v1039
        %v1057 = vcombine.high %v1031, %v1039
        %v1059 = vunpack.c.l.s4 1934713408
        %v1060 = vunpack.c.0.s8 %v1059
        %v1061 = vlaneseq
        %v1062 = vshrl.u32 %v1061, 7
        %v1063 = vsub.s32 %v1060, %v1062
        %v1064 = vrot.slane %v1056, %v1063
        %v1066 = vunpack.c.l.s4 1934713408
        %v1067 = vunpack.c.0.s8 %v1066
        %v1068 = vlaneseq
        %v1069 = vshrl.u32 %v1068, 7
        %v1070 = vsub.s32 %v1067, %v1069
        %v1071 = vrot.slane %v1057, %v1070
        %v1072 = vcombine.low %v1047, %v1055
        %v1073 = vcombine.high %v1047, %v1055
        %v1075 = vunpack.c.l.s4 1934713408
        %v1076 = vunpack.c.0.s8 %v1075
        %v1077 = vlaneseq
        %v1078 = vshrl.u32 %v1077, 7
        %v1079 = vsub.s32 %v1076, %v1078
        %v1080 = vrot.slane %v1072, %v1079
        %v1082 = vunpack.c.l.s4 1934713408
        %v1083 = vunpack.c.0.s8 %v1082
        %v1084 = vlaneseq
        %v1085 = vshrl.u32 %v1084, 7
        %v1086 = vsub.s32 %v1083, %v1085
        %v1087 = vrot.slane %v1073, %v1086
        %v1088 = vcombine.low %v1064, %v1080
        %v1089 = vcombine.high %v1064, %v1080
        %v1090 = vcombine.low %v1071, %v1087
        %v1091 = vcombine.high %v1071, %v1087
        %vm1092 = vcmask 64512
        %v1094 = vsel %vm1092, %v796, 0
        %v1097 = vsel %vm1092, %v942, 0
        %1099 = vmatprep.subr.mxu0 0.0
        %1100 = vmatpush1.xpose.msra.mxu0 %v1097
        %1101 = vmatprep.subr.mxu0 0.0
        %1102 = vmatpush1.xpose.msra.mxu0 0.0
        %1103 = vmatprep.subr.mxu0 0.0
        %1104 = vmatpush1.xpose.msra.mxu0 0.0
        %1105 = vmatprep.subr.mxu0 0.0
        %1106 = vmatpush1.xpose.msra.mxu0 0.0
        %1107 = vmatprep.subr.mxu0 0.0
        %1108 = vmatpush1.xpose.msra.mxu0 0.0
        %1109 = vmatprep.subr.mxu0 0.0
        %1110 = vmatpush1.xpose.msra.mxu0 0.0
        %1111 = vmatprep.subr.mxu0 0.0
        %1112 = vmatpush1.xpose.msra.mxu0 0.0
        %1113 = vmatprep.subr.mxu0 0.0
        %1114 = vmatpush1.xpose.msra.mxu0 0.0
        %1115 = vmatprep.subr.mxu0 0.0
        %1116 = vmatpush1.xpose.msra.mxu0 0.0
        %1117 = vmatprep.subr.mxu0 0.0
        %1118 = vmatpush1.xpose.msra.mxu0 0.0
        %1119 = vmatprep.subr.mxu0 0.0
        %1120 = vmatpush1.xpose.msra.mxu0 0.0
        %1121 = vmatprep.subr.mxu0 0.0
        %1122 = vmatpush1.xpose.msra.mxu0 0.0
        %1123 = vmatprep.subr.mxu0 0.0
        %1124 = vmatpush1.xpose.msra.mxu0 0.0
        %1125 = vmatprep.subr.mxu0 0.0
        %1126 = vmatpush1.xpose.msra.mxu0 0.0
        %1127 = vmatprep.subr.mxu0 0.0
        %1128 = vmatpush1.xpose.msra.mxu0 0.0
        %1129 = vmatprep.subr.mxu0 0.0
        %1130 = vmatpush1.xpose.msra.mxu0 0.0
        %1131 = vmatprep.subr.mxu0 0.0
        %1132 = vmatpush1.xpose.msra.mxu0 0.0
        %1133 = vmatprep.subr.mxu0 0.0
        %1134 = vmatpush1.xpose.msra.mxu0 0.0
        %1135 = vmatprep.subr.mxu0 0.0
        %1136 = vmatpush1.xpose.msra.mxu0 0.0
        %1137 = vmatprep.subr.mxu0 0.0
        %1138 = vmatpush1.xpose.msra.mxu0 0.0
        %1139 = vmatprep.subr.mxu0 0.0
        %1140 = vmatpush1.xpose.msra.mxu0 0.0
        %1141 = vmatprep.subr.mxu0 0.0
        %1142 = vmatpush1.xpose.msra.mxu0 0.0
        %1143 = vmatprep.subr.mxu0 0.0
        %1144 = vmatpush1.xpose.msra.mxu0 0.0
        %1145 = vmatprep.subr.mxu0 0.0
        %1146 = vmatpush1.xpose.msra.mxu0 0.0
        %1147 = vmatprep.subr.mxu0 0.0
        %1148 = vmatpush1.xpose.msra.mxu0 0.0
        %1149 = vmatprep.subr.mxu0 0.0
        %1150 = vmatpush1.xpose.msra.mxu0 0.0
        %1151 = vmatprep.subr.mxu0 0.0
        %1152 = vmatpush1.xpose.msra.mxu0 0.0
        %1153 = vmatprep.subr.mxu0 0.0
        %1154 = vmatpush1.xpose.msra.mxu0 0.0
        %1155 = vmatprep.subr.mxu0 0.0
        %1156 = vmatpush1.xpose.msra.mxu0 0.0
        %1157 = vmatprep.subr.mxu0 0.0
        %1158 = vmatpush1.xpose.msra.mxu0 0.0
        %1159 = vmatprep.subr.mxu0 0.0
        %1160 = vmatpush1.xpose.msra.mxu0 0.0
        %1161 = vmatprep.subr.mxu0 0.0
        %1162 = vmatpush1.xpose.msra.mxu0 0.0
        %1163 = vmatprep.mubr.f32.mxu0 0.0
        %1164 = vmatmul.mubr.f32.gmra.mrb[0].mxu0 %v1094
        %v1165 = vpop.f32.mrb[0].mxu0
        %v1166 = vadd.f32 0.0, %v1165
        %v1167 = vpop.f32.mrb[0].mxu0
        %1168 = vdwg.mxu0
        %v1170 = vsel %vm1092, %v797, 0
        %v1173 = vsel %vm1092, %v943, 0
        %1175 = vmatprep.subr.mxu0 0.0
        %1176 = vmatpush1.xpose.msra.mxu0 %v1173
        %1177 = vmatprep.subr.mxu0 0.0
        %1178 = vmatpush1.xpose.msra.mxu0 0.0
        %1179 = vmatprep.subr.mxu0 0.0
        %1180 = vmatpush1.xpose.msra.mxu0 0.0
        %1181 = vmatprep.subr.mxu0 0.0
        %1182 = vmatpush1.xpose.msra.mxu0 0.0
        %1183 = vmatprep.subr.mxu0 0.0
        %1184 = vmatpush1.xpose.msra.mxu0 0.0
        %1185 = vmatprep.subr.mxu0 0.0
        %1186 = vmatpush1.xpose.msra.mxu0 0.0
        %1187 = vmatprep.subr.mxu0 0.0
        %1188 = vmatpush1.xpose.msra.mxu0 0.0
        %1189 = vmatprep.subr.mxu0 0.0
        %1190 = vmatpush1.xpose.msra.mxu0 0.0
        %1191 = vmatprep.subr.mxu0 0.0
        %1192 = vmatpush1.xpose.msra.mxu0 0.0
        %1193 = vmatprep.subr.mxu0 0.0
        %1194 = vmatpush1.xpose.msra.mxu0 0.0
        %1195 = vmatprep.subr.mxu0 0.0
        %1196 = vmatpush1.xpose.msra.mxu0 0.0
        %1197 = vmatprep.subr.mxu0 0.0
        %1198 = vmatpush1.xpose.msra.mxu0 0.0
        %1199 = vmatprep.subr.mxu0 0.0
        %1200 = vmatpush1.xpose.msra.mxu0 0.0
        %1201 = vmatprep.subr.mxu0 0.0
        %1202 = vmatpush1.xpose.msra.mxu0 0.0
        %1203 = vmatprep.subr.mxu0 0.0
        %1204 = vmatpush1.xpose.msra.mxu0 0.0
        %1205 = vmatprep.subr.mxu0 0.0
        %1206 = vmatpush1.xpose.msra.mxu0 0.0
        %1207 = vmatprep.subr.mxu0 0.0
        %1208 = vmatpush1.xpose.msra.mxu0 0.0
        %1209 = vmatprep.subr.mxu0 0.0
        %1210 = vmatpush1.xpose.msra.mxu0 0.0
        %1211 = vmatprep.subr.mxu0 0.0
        %1212 = vmatpush1.xpose.msra.mxu0 0.0
        %1213 = vmatprep.subr.mxu0 0.0
        %1214 = vmatpush1.xpose.msra.mxu0 0.0
        %1215 = vmatprep.subr.mxu0 0.0
        %1216 = vmatpush1.xpose.msra.mxu0 0.0
        %1217 = vmatprep.subr.mxu0 0.0
        %1218 = vmatpush1.xpose.msra.mxu0 0.0
        %1219 = vmatprep.subr.mxu0 0.0
        %1220 = vmatpush1.xpose.msra.mxu0 0.0
        %1221 = vmatprep.subr.mxu0 0.0
        %1222 = vmatpush1.xpose.msra.mxu0 0.0
        %1223 = vmatprep.subr.mxu0 0.0
        %1224 = vmatpush1.xpose.msra.mxu0 0.0
        %1225 = vmatprep.subr.mxu0 0.0
        %1226 = vmatpush1.xpose.msra.mxu0 0.0
        %1227 = vmatprep.subr.mxu0 0.0
        %1228 = vmatpush1.xpose.msra.mxu0 0.0
        %1229 = vmatprep.subr.mxu0 0.0
        %1230 = vmatpush1.xpose.msra.mxu0 0.0
        %1231 = vmatprep.subr.mxu0 0.0
        %1232 = vmatpush1.xpose.msra.mxu0 0.0
        %1233 = vmatprep.subr.mxu0 0.0
        %1234 = vmatpush1.xpose.msra.mxu0 0.0
        %1235 = vmatprep.subr.mxu0 0.0
        %1236 = vmatpush1.xpose.msra.mxu0 0.0
        %1237 = vmatprep.subr.mxu0 0.0
        %1238 = vmatpush1.xpose.msra.mxu0 0.0
        %1239 = vmatprep.mubr.f32.mxu0 0.0
        %1240 = vmatmul.mubr.f32.gmra.mrb[0].mxu0 %v1170
        %v1241 = vpop.f32.mrb[0].mxu0
        %v1242 = vadd.f32 0.0, %v1241
        %v1243 = vpop.f32.mrb[0].mxu0
        %1244 = vdwg.mxu0
        %v1246 = vsel %vm1092, %v798, 0
        %v1249 = vsel %vm1092, %v944, 0
        %1251 = vmatprep.subr.mxu0 0.0
        %1252 = vmatpush1.xpose.msra.mxu0 %v1249
        %1253 = vmatprep.subr.mxu0 0.0
        %1254 = vmatpush1.xpose.msra.mxu0 0.0
        %1255 = vmatprep.subr.mxu0 0.0
        %1256 = vmatpush1.xpose.msra.mxu0 0.0
        %1257 = vmatprep.subr.mxu0 0.0
        %1258 = vmatpush1.xpose.msra.mxu0 0.0
        %1259 = vmatprep.subr.mxu0 0.0
        %1260 = vmatpush1.xpose.msra.mxu0 0.0
        %1261 = vmatprep.subr.mxu0 0.0
        %1262 = vmatpush1.xpose.msra.mxu0 0.0
        %1263 = vmatprep.subr.mxu0 0.0
        %1264 = vmatpush1.xpose.msra.mxu0 0.0
        %1265 = vmatprep.subr.mxu0 0.0
        %1266 = vmatpush1.xpose.msra.mxu0 0.0
        %1267 = vmatprep.subr.mxu0 0.0
        %1268 = vmatpush1.xpose.msra.mxu0 0.0
        %1269 = vmatprep.subr.mxu0 0.0
        %1270 = vmatpush1.xpose.msra.mxu0 0.0
        %1271 = vmatprep.subr.mxu0 0.0
        %1272 = vmatpush1.xpose.msra.mxu0 0.0
        %1273 = vmatprep.subr.mxu0 0.0
        %1274 = vmatpush1.xpose.msra.mxu0 0.0
        %1275 = vmatprep.subr.mxu0 0.0
        %1276 = vmatpush1.xpose.msra.mxu0 0.0
        %1277 = vmatprep.subr.mxu0 0.0
        %1278 = vmatpush1.xpose.msra.mxu0 0.0
        %1279 = vmatprep.subr.mxu0 0.0
        %1280 = vmatpush1.xpose.msra.mxu0 0.0
        %1281 = vmatprep.subr.mxu0 0.0
        %1282 = vmatpush1.xpose.msra.mxu0 0.0
        %1283 = vmatprep.subr.mxu0 0.0
        %1284 = vmatpush1.xpose.msra.mxu0 0.0
        %1285 = vmatprep.subr.mxu0 0.0
        %1286 = vmatpush1.xpose.msra.mxu0 0.0
        %1287 = vmatprep.subr.mxu0 0.0
        %1288 = vmatpush1.xpose.msra.mxu0 0.0
        %1289 = vmatprep.subr.mxu0 0.0
        %1290 = vmatpush1.xpose.msra.mxu0 0.0
        %1291 = vmatprep.subr.mxu0 0.0
        %1292 = vmatpush1.xpose.msra.mxu0 0.0
        %1293 = vmatprep.subr.mxu0 0.0
        %1294 = vmatpush1.xpose.msra.mxu0 0.0
        %1295 = vmatprep.subr.mxu0 0.0
        %1296 = vmatpush1.xpose.msra.mxu0 0.0
        %1297 = vmatprep.subr.mxu0 0.0
        %1298 = vmatpush1.xpose.msra.mxu0 0.0
        %1299 = vmatprep.subr.mxu0 0.0
        %1300 = vmatpush1.xpose.msra.mxu0 0.0
        %1301 = vmatprep.subr.mxu0 0.0
        %1302 = vmatpush1.xpose.msra.mxu0 0.0
        %1303 = vmatprep.subr.mxu0 0.0
        %1304 = vmatpush1.xpose.msra.mxu0 0.0
        %1305 = vmatprep.subr.mxu0 0.0
        %1306 = vmatpush1.xpose.msra.mxu0 0.0
        %1307 = vmatprep.subr.mxu0 0.0
        %1308 = vmatpush1.xpose.msra.mxu0 0.0
        %1309 = vmatprep.subr.mxu0 0.0
        %1310 = vmatpush1.xpose.msra.mxu0 0.0
        %1311 = vmatprep.subr.mxu0 0.0
        %1312 = vmatpush1.xpose.msra.mxu0 0.0
        %1313 = vmatprep.subr.mxu0 0.0
        %1314 = vmatpush1.xpose.msra.mxu0 0.0
        %1315 = vmatprep.mubr.f32.mxu0 0.0
        %1316 = vmatmul.mubr.f32.gmra.mrb[0].mxu0 %v1246
        %v1317 = vpop.f32.mrb[0].mxu0
        %v1318 = vadd.f32 0.0, %v1317
        %v1319 = vpop.f32.mrb[0].mxu0
        %1320 = vdwg.mxu0
        %v1322 = vsel %vm1092, %v799, 0
        %v1325 = vsel %vm1092, %v945, 0
        %1327 = vmatprep.subr.mxu0 0.0
        %1328 = vmatpush1.xpose.msra.mxu0 %v1325
        %1329 = vmatprep.subr.mxu0 0.0
        %1330 = vmatpush1.xpose.msra.mxu0 0.0
        %1331 = vmatprep.subr.mxu0 0.0
        %1332 = vmatpush1.xpose.msra.mxu0 0.0
        %1333 = vmatprep.subr.mxu0 0.0
        %1334 = vmatpush1.xpose.msra.mxu0 0.0
        %1335 = vmatprep.subr.mxu0 0.0
        %1336 = vmatpush1.xpose.msra.mxu0 0.0
        %1337 = vmatprep.subr.mxu0 0.0
        %1338 = vmatpush1.xpose.msra.mxu0 0.0
        %1339 = vmatprep.subr.mxu0 0.0
        %1340 = vmatpush1.xpose.msra.mxu0 0.0
        %1341 = vmatprep.subr.mxu0 0.0
        %1342 = vmatpush1.xpose.msra.mxu0 0.0
        %1343 = vmatprep.subr.mxu0 0.0
        %1344 = vmatpush1.xpose.msra.mxu0 0.0
        %1345 = vmatprep.subr.mxu0 0.0
        %1346 = vmatpush1.xpose.msra.mxu0 0.0
        %1347 = vmatprep.subr.mxu0 0.0
        %1348 = vmatpush1.xpose.msra.mxu0 0.0
        %1349 = vmatprep.subr.mxu0 0.0
        %1350 = vmatpush1.xpose.msra.mxu0 0.0
        %1351 = vmatprep.subr.mxu0 0.0
        %1352 = vmatpush1.xpose.msra.mxu0 0.0
        %1353 = vmatprep.subr.mxu0 0.0
        %1354 = vmatpush1.xpose.msra.mxu0 0.0
        %1355 = vmatprep.subr.mxu0 0.0
        %1356 = vmatpush1.xpose.msra.mxu0 0.0
        %1357 = vmatprep.subr.mxu0 0.0
        %1358 = vmatpush1.xpose.msra.mxu0 0.0
        %1359 = vmatprep.subr.mxu0 0.0
        %1360 = vmatpush1.xpose.msra.mxu0 0.0
        %1361 = vmatprep.subr.mxu0 0.0
        %1362 = vmatpush1.xpose.msra.mxu0 0.0
        %1363 = vmatprep.subr.mxu0 0.0
        %1364 = vmatpush1.xpose.msra.mxu0 0.0
        %1365 = vmatprep.subr.mxu0 0.0
        %1366 = vmatpush1.xpose.msra.mxu0 0.0
        %1367 = vmatprep.subr.mxu0 0.0
        %1368 = vmatpush1.xpose.msra.mxu0 0.0
        %1369 = vmatprep.subr.mxu0 0.0
        %1370 = vmatpush1.xpose.msra.mxu0 0.0
        %1371 = vmatprep.subr.mxu0 0.0
        %1372 = vmatpush1.xpose.msra.mxu0 0.0
        %1373 = vmatprep.subr.mxu0 0.0
        %1374 = vmatpush1.xpose.msra.mxu0 0.0
        %1375 = vmatprep.subr.mxu0 0.0
        %1376 = vmatpush1.xpose.msra.mxu0 0.0
        %1377 = vmatprep.subr.mxu0 0.0
        %1378 = vmatpush1.xpose.msra.mxu0 0.0
        %1379 = vmatprep.subr.mxu0 0.0
        %1380 = vmatpush1.xpose.msra.mxu0 0.0
        %1381 = vmatprep.subr.mxu0 0.0
        %1382 = vmatpush1.xpose.msra.mxu0 0.0
        %1383 = vmatprep.subr.mxu0 0.0
        %1384 = vmatpush1.xpose.msra.mxu0 0.0
        %1385 = vmatprep.subr.mxu0 0.0
        %1386 = vmatpush1.xpose.msra.mxu0 0.0
        %1387 = vmatprep.subr.mxu0 0.0
        %1388 = vmatpush1.xpose.msra.mxu0 0.0
        %1389 = vmatprep.subr.mxu0 0.0
        %1390 = vmatpush1.xpose.msra.mxu0 0.0
        %1391 = vmatprep.mubr.f32.mxu0 0.0
        %1392 = vmatmul.mubr.f32.gmra.mrb[0].mxu0 %v1322
        %v1393 = vpop.f32.mrb[0].mxu0
        %v1394 = vadd.f32 0.0, %v1393
        %v1395 = vpop.f32.mrb[0].mxu0
        %1396 = vdwg.mxu0
        %v1397 = vlaneseq
        %v1398 = vshrl.u32 %v1397, 7
        %v1399 = vstv %s421
        %v1400 = vadd.s32 %v1398, %v1399
        %v1401 = vlaneseq
        %v1402 = vand.u32 %v1401, 127
        %vm1403 = vcmp.ge.s32.totalorder %v1400, %v1402
        %v1404 = vsel %vm1403, 1, 0
        %vm1405 = vcmp.eq.s32.totalorder %v1404, 1
        %v1406 = vsel %vm1405, %v1166, -3.4028235e+38
        %v1407 = vsel %vm1405, %v1242, -3.4028235e+38
        %v1408 = vsel %vm1405, %v1318, -3.4028235e+38
        %v1409 = vsel %vm1405, %v1394, -3.4028235e+38
        %v1410 = vsel %vm1092, %v1406, -inf
        %1411 = vmax.xlane.f32.xlu0 %v1410
        %v1412 = vpop.xlane.xlu0 %1411
        %v1413 = vsel %vm1092, %v1407, -inf
        %1414 = vmax.xlane.f32.xlu0 %v1413
        %v1415 = vpop.xlane.xlu0 %1414
        %v1416 = vsel %vm1092, %v1408, -inf
        %1417 = vmax.xlane.f32.xlu0 %v1416
        %v1418 = vpop.xlane.xlu0 %1417
        %v1419 = vsel %vm1092, %v1409, -inf
        %1420 = vmax.xlane.f32.xlu0 %v1419
        %v1421 = vpop.xlane.xlu0 %1420
        %v1422 = vsub.f32 %v1406, %v1412
        %v1423 = vsub.f32 %v1407, %v1415
        %v1424 = vsub.f32 %v1408, %v1418
        %v1425 = vsub.f32 %v1409, %v1421
        %v1426 = vmul.f32 %v1422, 1.442695
        %v1427 = vpow.pop %v1426
        %v1428 = vmul.f32 %v1423, 1.442695
        %v1429 = vpow.pop %v1428
        %v1430 = vmul.f32 %v1424, 1.442695
        %v1431 = vpow.pop %v1430
        %v1432 = vmul.f32 %v1425, 1.442695
        %v1433 = vpow.pop %v1432
        %v1434 = vsel %vm1092, %v1427, 0.0
        %1435 = vadd.xlane.f32.xlu0 %v1434
        %v1436 = vpop.xlane.xlu0 %1435
        %v1437 = vsel %vm1092, %v1429, 0.0
        %1438 = vadd.xlane.f32.xlu0 %v1437
        %v1439 = vpop.xlane.xlu0 %1438
        %v1440 = vsel %vm1092, %v1431, 0.0
        %1441 = vadd.xlane.f32.xlu0 %v1440
        %v1442 = vpop.xlane.xlu0 %1441
        %v1443 = vsel %vm1092, %v1433, 0.0
        %1444 = vadd.xlane.f32.xlu0 %v1443
        %v1445 = vpop.xlane.xlu0 %1444
        %v1446 = vrcp.pop %v1436
        %v1447 = vmul.f32 %v1427, %v1446
        %v1448 = vrcp.pop %v1439
        %v1449 = vmul.f32 %v1429, %v1448
        %v1450 = vrcp.pop %v1442
        %v1451 = vmul.f32 %v1431, %v1450
        %v1452 = vrcp.pop %v1445
        %v1453 = vmul.f32 %v1433, %v1452
        %1454 = vst.msk [vmem:[%s419] sm:$0xff] %vm1092, %v1447
        %1455 = vst.msk [vmem:[%s419 + $0x8] sm:$0xff] %vm1092, %v1449
        %1456 = vst.msk [vmem:[%s419 + $0x10] sm:$0xff] %vm1092, %v1451
        %1457 = vst.msk [vmem:[%s419 + $0x18] sm:$0xff] %vm1092, %v1453
        %v1459 = vsel %vm1092, %v1447, 0
        %1461 = vmatprep.subr.mxu0 0.0
        %1462 = vmatpush1.msra.mxu0 %v1088
        %1463 = vmatprep.subr.mxu0 0.0
        %1464 = vmatpush1.msra.mxu0 0.0
        %1465 = vmatprep.subr.mxu0 0.0
        %1466 = vmatpush1.msra.mxu0 0.0
        %1467 = vmatprep.subr.mxu0 0.0
        %1468 = vmatpush1.msra.mxu0 0.0
        %1469 = vmatprep.subr.mxu0 0.0
        %1470 = vmatpush1.msra.mxu0 0.0
        %1471 = vmatprep.subr.mxu0 0.0
        %1472 = vmatpush1.msra.mxu0 0.0
        %1473 = vmatprep.subr.mxu0 0.0
        %1474 = vmatpush1.msra.mxu0 0.0
        %1475 = vmatprep.subr.mxu0 0.0
        %1476 = vmatpush1.msra.mxu0 0.0
        %1477 = vmatprep.subr.mxu0 0.0
        %1478 = vmatpush1.msra.mxu0 0.0
        %1479 = vmatprep.subr.mxu0 0.0
        %1480 = vmatpush1.msra.mxu0 0.0
        %1481 = vmatprep.subr.mxu0 0.0
        %1482 = vmatpush1.msra.mxu0 0.0
        %1483 = vmatprep.subr.mxu0 0.0
        %1484 = vmatpush1.msra.mxu0 0.0
        %1485 = vmatprep.subr.mxu0 0.0
        %1486 = vmatpush1.msra.mxu0 0.0
        %1487 = vmatprep.subr.mxu0 0.0
        %1488 = vmatpush1.msra.mxu0 0.0
        %1489 = vmatprep.subr.mxu0 0.0
        %1490 = vmatpush1.msra.mxu0 0.0
        %1491 = vmatprep.subr.mxu0 0.0
        %1492 = vmatpush1.msra.mxu0 0.0
        %1493 = vmatprep.subr.mxu0 0.0
        %1494 = vmatpush1.msra.mxu0 0.0
        %1495 = vmatprep.subr.mxu0 0.0
        %1496 = vmatpush1.msra.mxu0 0.0
        %1497 = vmatprep.subr.mxu0 0.0
        %1498 = vmatpush1.msra.mxu0 0.0
        %1499 = vmatprep.subr.mxu0 0.0
        %1500 = vmatpush1.msra.mxu0 0.0
        %1501 = vmatprep.subr.mxu0 0.0
        %1502 = vmatpush1.msra.mxu0 0.0
        %1503 = vmatprep.subr.mxu0 0.0
        %1504 = vmatpush1.msra.mxu0 0.0
        %1505 = vmatprep.subr.mxu0 0.0
        %1506 = vmatpush1.msra.mxu0 0.0
        %1507 = vmatprep.subr.mxu0 0.0
        %1508 = vmatpush1.msra.mxu0 0.0
        %1509 = vmatprep.subr.mxu0 0.0
        %1510 = vmatpush1.msra.mxu0 0.0
        %1511 = vmatprep.subr.mxu0 0.0
        %1512 = vmatpush1.msra.mxu0 0.0
        %1513 = vmatprep.subr.mxu0 0.0
        %1514 = vmatpush1.msra.mxu0 0.0
        %1515 = vmatprep.subr.mxu0 0.0
        %1516 = vmatpush1.msra.mxu0 0.0
        %1517 = vmatprep.subr.mxu0 0.0
        %1518 = vmatpush1.msra.mxu0 0.0
        %1519 = vmatprep.subr.mxu0 0.0
        %1520 = vmatpush1.msra.mxu0 0.0
        %1521 = vmatprep.subr.mxu0 0.0
        %1522 = vmatpush1.msra.mxu0 0.0
        %1523 = vmatprep.subr.mxu0 0.0
        %1524 = vmatpush1.msra.mxu0 0.0
        %1525 = vmatprep.mubr.f32.mxu0 0.0
        %1526 = vmatmul.mubr.f32.gmra.mrb[0].mxu0 %v1459
        %v1527 = vpop.f32.mrb[0].mxu0
        %v1528 = vadd.f32 0.0, %v1527
        %v1529 = vpop.f32.mrb[0].mxu0
        %1530 = vdwg.mxu0
        %v1532 = vsel %vm1092, %v1449, 0
        %1534 = vmatprep.subr.mxu0 0.0
        %1535 = vmatpush1.msra.mxu0 %v1089
        %1536 = vmatprep.subr.mxu0 0.0
        %1537 = vmatpush1.msra.mxu0 0.0
        %1538 = vmatprep.subr.mxu0 0.0
        %1539 = vmatpush1.msra.mxu0 0.0
        %1540 = vmatprep.subr.mxu0 0.0
        %1541 = vmatpush1.msra.mxu0 0.0
        %1542 = vmatprep.subr.mxu0 0.0
        %1543 = vmatpush1.msra.mxu0 0.0
        %1544 = vmatprep.subr.mxu0 0.0
        %1545 = vmatpush1.msra.mxu0 0.0
        %1546 = vmatprep.subr.mxu0 0.0
        %1547 = vmatpush1.msra.mxu0 0.0
        %1548 = vmatprep.subr.mxu0 0.0
        %1549 = vmatpush1.msra.mxu0 0.0
        %1550 = vmatprep.subr.mxu0 0.0
        %1551 = vmatpush1.msra.mxu0 0.0
        %1552 = vmatprep.subr.mxu0 0.0
        %1553 = vmatpush1.msra.mxu0 0.0
        %1554 = vmatprep.subr.mxu0 0.0
        %1555 = vmatpush1.msra.mxu0 0.0
        %1556 = vmatprep.subr.mxu0 0.0
        %1557 = vmatpush1.msra.mxu0 0.0
        %1558 = vmatprep.subr.mxu0 0.0
        %1559 = vmatpush1.msra.mxu0 0.0
        %1560 = vmatprep.subr.mxu0 0.0
        %1561 = vmatpush1.msra.mxu0 0.0
        %1562 = vmatprep.subr.mxu0 0.0
        %1563 = vmatpush1.msra.mxu0 0.0
        %1564 = vmatprep.subr.mxu0 0.0
        %1565 = vmatpush1.msra.mxu0 0.0
        %1566 = vmatprep.subr.mxu0 0.0
        %1567 = vmatpush1.msra.mxu0 0.0
        %1568 = vmatprep.subr.mxu0 0.0
        %1569 = vmatpush1.msra.mxu0 0.0
        %1570 = vmatprep.subr.mxu0 0.0
        %1571 = vmatpush1.msra.mxu0 0.0
        %1572 = vmatprep.subr.mxu0 0.0
        %1573 = vmatpush1.msra.mxu0 0.0
        %1574 = vmatprep.subr.mxu0 0.0
        %1575 = vmatpush1.msra.mxu0 0.0
        %1576 = vmatprep.subr.mxu0 0.0
        %1577 = vmatpush1.msra.mxu0 0.0
        %1578 = vmatprep.subr.mxu0 0.0
        %1579 = vmatpush1.msra.mxu0 0.0
        %1580 = vmatprep.subr.mxu0 0.0
        %1581 = vmatpush1.msra.mxu0 0.0
        %1582 = vmatprep.subr.mxu0 0.0
        %1583 = vmatpush1.msra.mxu0 0.0
        %1584 = vmatprep.subr.mxu0 0.0
        %1585 = vmatpush1.msra.mxu0 0.0
        %1586 = vmatprep.subr.mxu0 0.0
        %1587 = vmatpush1.msra.mxu0 0.0
        %1588 = vmatprep.subr.mxu0 0.0
        %1589 = vmatpush1.msra.mxu0 0.0
        %1590 = vmatprep.subr.mxu0 0.0
        %1591 = vmatpush1.msra.mxu0 0.0
        %1592 = vmatprep.subr.mxu0 0.0
        %1593 = vmatpush1.msra.mxu0 0.0
        %1594 = vmatprep.subr.mxu0 0.0
        %1595 = vmatpush1.msra.mxu0 0.0
        %1596 = vmatprep.subr.mxu0 0.0
        %1597 = vmatpush1.msra.mxu0 0.0
        %1598 = vmatprep.mubr.f32.mxu0 0.0
        %1599 = vmatmul.mubr.f32.gmra.mrb[0].mxu0 %v1532
        %v1600 = vpop.f32.mrb[0].mxu0
        %v1601 = vadd.f32 0.0, %v1600
        %v1602 = vpop.f32.mrb[0].mxu0
        %1603 = vdwg.mxu0
        %v1605 = vsel %vm1092, %v1451, 0
        %1607 = vmatprep.subr.mxu0 0.0
        %1608 = vmatpush1.msra.mxu0 %v1090
        %1609 = vmatprep.subr.mxu0 0.0
        %1610 = vmatpush1.msra.mxu0 0.0
        %1611 = vmatprep.subr.mxu0 0.0
        %1612 = vmatpush1.msra.mxu0 0.0
        %1613 = vmatprep.subr.mxu0 0.0
        %1614 = vmatpush1.msra.mxu0 0.0
        %1615 = vmatprep.subr.mxu0 0.0
        %1616 = vmatpush1.msra.mxu0 0.0
        %1617 = vmatprep.subr.mxu0 0.0
        %1618 = vmatpush1.msra.mxu0 0.0
        %1619 = vmatprep.subr.mxu0 0.0
        %1620 = vmatpush1.msra.mxu0 0.0
        %1621 = vmatprep.subr.mxu0 0.0
        %1622 = vmatpush1.msra.mxu0 0.0
        %1623 = vmatprep.subr.mxu0 0.0
        %1624 = vmatpush1.msra.mxu0 0.0
        %1625 = vmatprep.subr.mxu0 0.0
        %1626 = vmatpush1.msra.mxu0 0.0
        %1627 = vmatprep.subr.mxu0 0.0
        %1628 = vmatpush1.msra.mxu0 0.0
        %1629 = vmatprep.subr.mxu0 0.0
        %1630 = vmatpush1.msra.mxu0 0.0
        %1631 = vmatprep.subr.mxu0 0.0
        %1632 = vmatpush1.msra.mxu0 0.0
        %1633 = vmatprep.subr.mxu0 0.0
        %1634 = vmatpush1.msra.mxu0 0.0
        %1635 = vmatprep.subr.mxu0 0.0
        %1636 = vmatpush1.msra.mxu0 0.0
        %1637 = vmatprep.subr.mxu0 0.0
        %1638 = vmatpush1.msra.mxu0 0.0
        %1639 = vmatprep.subr.mxu0 0.0
        %1640 = vmatpush1.msra.mxu0 0.0
        %1641 = vmatprep.subr.mxu0 0.0
        %1642 = vmatpush1.msra.mxu0 0.0
        %1643 = vmatprep.subr.mxu0 0.0
        %1644 = vmatpush1.msra.mxu0 0.0
        %1645 = vmatprep.subr.mxu0 0.0
        %1646 = vmatpush1.msra.mxu0 0.0
        %1647 = vmatprep.subr.mxu0 0.0
        %1648 = vmatpush1.msra.mxu0 0.0
        %1649 = vmatprep.subr.mxu0 0.0
        %1650 = vmatpush1.msra.mxu0 0.0
        %1651 = vmatprep.subr.mxu0 0.0
        %1652 = vmatpush1.msra.mxu0 0.0
        %1653 = vmatprep.subr.mxu0 0.0
        %1654 = vmatpush1.msra.mxu0 0.0
        %1655 = vmatprep.subr.mxu0 0.0
        %1656 = vmatpush1.msra.mxu0 0.0
        %1657 = vmatprep.subr.mxu0 0.0
        %1658 = vmatpush1.msra.mxu0 0.0
        %1659 = vmatprep.subr.mxu0 0.0
        %1660 = vmatpush1.msra.mxu0 0.0
        %1661 = vmatprep.subr.mxu0 0.0
        %1662 = vmatpush1.msra.mxu0 0.0
        %1663 = vmatprep.subr.mxu0 0.0
        %1664 = vmatpush1.msra.mxu0 0.0
        %1665 = vmatprep.subr.mxu0 0.0
        %1666 = vmatpush1.msra.mxu0 0.0
        %1667 = vmatprep.subr.mxu0 0.0
        %1668 = vmatpush1.msra.mxu0 0.0
        %1669 = vmatprep.subr.mxu0 0.0
        %1670 = vmatpush1.msra.mxu0 0.0
        %1671 = vmatprep.mubr.f32.mxu0 0.0
        %1672 = vmatmul.mubr.f32.gmra.mrb[0].mxu0 %v1605
        %v1673 = vpop.f32.mrb[0].mxu0
        %v1674 = vadd.f32 0.0, %v1673
        %v1675 = vpop.f32.mrb[0].mxu0
        %1676 = vdwg.mxu0
        %v1678 = vsel %vm1092, %v1453, 0
        %1680 = vmatprep.subr.mxu0 0.0
        %1681 = vmatpush1.msra.mxu0 %v1091
        %1682 = vmatprep.subr.mxu0 0.0
        %1683 = vmatpush1.msra.mxu0 0.0
        %1684 = vmatprep.subr.mxu0 0.0
        %1685 = vmatpush1.msra.mxu0 0.0
        %1686 = vmatprep.subr.mxu0 0.0
        %1687 = vmatpush1.msra.mxu0 0.0
        %1688 = vmatprep.subr.mxu0 0.0
        %1689 = vmatpush1.msra.mxu0 0.0
        %1690 = vmatprep.subr.mxu0 0.0
        %1691 = vmatpush1.msra.mxu0 0.0
        %1692 = vmatprep.subr.mxu0 0.0
        %1693 = vmatpush1.msra.mxu0 0.0
        %1694 = vmatprep.subr.mxu0 0.0
        %1695 = vmatpush1.msra.mxu0 0.0
        %1696 = vmatprep.subr.mxu0 0.0
        %1697 = vmatpush1.msra.mxu0 0.0
        %1698 = vmatprep.subr.mxu0 0.0
        %1699 = vmatpush1.msra.mxu0 0.0
        %1700 = vmatprep.subr.mxu0 0.0
        %1701 = vmatpush1.msra.mxu0 0.0
        %1702 = vmatprep.subr.mxu0 0.0
        %1703 = vmatpush1.msra.mxu0 0.0
        %1704 = vmatprep.subr.mxu0 0.0
        %1705 = vmatpush1.msra.mxu0 0.0
        %1706 = vmatprep.subr.mxu0 0.0
        %1707 = vmatpush1.msra.mxu0 0.0
        %1708 = vmatprep.subr.mxu0 0.0
        %1709 = vmatpush1.msra.mxu0 0.0
        %1710 = vmatprep.subr.mxu0 0.0
        %1711 = vmatpush1.msra.mxu0 0.0
        %1712 = vmatprep.subr.mxu0 0.0
        %1713 = vmatpush1.msra.mxu0 0.0
        %1714 = vmatprep.subr.mxu0 0.0
        %1715 = vmatpush1.msra.mxu0 0.0
        %1716 = vmatprep.subr.mxu0 0.0
        %1717 = vmatpush1.msra.mxu0 0.0
        %1718 = vmatprep.subr.mxu0 0.0
        %1719 = vmatpush1.msra.mxu0 0.0
        %1720 = vmatprep.subr.mxu0 0.0
        %1721 = vmatpush1.msra.mxu0 0.0
        %1722 = vmatprep.subr.mxu0 0.0
        %1723 = vmatpush1.msra.mxu0 0.0
        %1724 = vmatprep.subr.mxu0 0.0
        %1725 = vmatpush1.msra.mxu0 0.0
        %1726 = vmatprep.subr.mxu0 0.0
        %1727 = vmatpush1.msra.mxu0 0.0
        %1728 = vmatprep.subr.mxu0 0.0
        %1729 = vmatpush1.msra.mxu0 0.0
        %1730 = vmatprep.subr.mxu0 0.0
        %1731 = vmatpush1.msra.mxu0 0.0
        %1732 = vmatprep.subr.mxu0 0.0
        %1733 = vmatpush1.msra.mxu0 0.0
        %1734 = vmatprep.subr.mxu0 0.0
        %1735 = vmatpush1.msra.mxu0 0.0
        %1736 = vmatprep.subr.mxu0 0.0
        %1737 = vmatpush1.msra.mxu0 0.0
        %1738 = vmatprep.subr.mxu0 0.0
        %1739 = vmatpush1.msra.mxu0 0.0
        %1740 = vmatprep.subr.mxu0 0.0
        %1741 = vmatpush1.msra.mxu0 0.0
        %1742 = vmatprep.subr.mxu0 0.0
        %1743 = vmatpush1.msra.mxu0 0.0
        %1744 = vmatprep.mubr.f32.mxu0 0.0
        %1745 = vmatmul.mubr.f32.gmra.mrb[0].mxu0 %v1678
        %v1746 = vpop.f32.mrb[0].mxu0
        %v1747 = vadd.f32 0.0, %v1746
        %v1748 = vpop.f32.mrb[0].mxu0
        %1749 = vdwg.mxu0
        %v1750 = vcombine.low %v1528, %v1674
        %v1751 = vcombine.high %v1528, %v1674
        %v1753 = vunpack.c.l.s4 1983009808
        %v1754 = vunpack.c.0.s8 %v1753
        %v1755 = vlaneseq
        %v1756 = vshrl.u32 %v1755, 7
        %v1757 = vsub.s32 %v1754, %v1756
        %v1758 = vrot.slane %v1750, %v1757
        %v1760 = vunpack.c.l.s4 1983009808
        %v1761 = vunpack.c.0.s8 %v1760
        %v1762 = vlaneseq
        %v1763 = vshrl.u32 %v1762, 7
        %v1764 = vsub.s32 %v1761, %v1763
        %v1765 = vrot.slane %v1751, %v1764
        %v1766 = vcombine.low %v1601, %v1747
        %v1767 = vcombine.high %v1601, %v1747
        %v1769 = vunpack.c.l.s4 1983009808
        %v1770 = vunpack.c.0.s8 %v1769
        %v1771 = vlaneseq
        %v1772 = vshrl.u32 %v1771, 7
        %v1773 = vsub.s32 %v1770, %v1772
        %v1774 = vrot.slane %v1766, %v1773
        %v1776 = vunpack.c.l.s4 1983009808
        %v1777 = vunpack.c.0.s8 %v1776
        %v1778 = vlaneseq
        %v1779 = vshrl.u32 %v1778, 7
        %v1780 = vsub.s32 %v1777, %v1779
        %v1781 = vrot.slane %v1767, %v1780
        %v1782 = vcombine.low %v1758, %v1774
        %v1783 = vcombine.high %v1758, %v1774
        %v1785 = vunpack.c.l.s4 1934713408
        %v1786 = vunpack.c.0.s8 %v1785
        %v1787 = vlaneseq
        %v1788 = vshrl.u32 %v1787, 7
        %v1789 = vsub.s32 %v1786, %v1788
        %v1790 = vrot.slane %v1782, %v1789
        %v1792 = vunpack.c.l.s4 1934713408
        %v1793 = vunpack.c.0.s8 %v1792
        %v1794 = vlaneseq
        %v1795 = vshrl.u32 %v1794, 7
        %v1796 = vsub.s32 %v1793, %v1795
        %v1797 = vrot.slane %v1783, %v1796
        %v1798 = vcombine.low %v1765, %v1781
        %v1799 = vcombine.high %v1765, %v1781
        %v1801 = vunpack.c.l.s4 1934713408
        %v1802 = vunpack.c.0.s8 %v1801
        %v1803 = vlaneseq
        %v1804 = vshrl.u32 %v1803, 7
        %v1805 = vsub.s32 %v1802, %v1804
        %v1806 = vrot.slane %v1798, %v1805
        %v1808 = vunpack.c.l.s4 1934713408
        %v1809 = vunpack.c.0.s8 %v1808
        %v1810 = vlaneseq
        %v1811 = vshrl.u32 %v1810, 7
        %v1812 = vsub.s32 %v1809, %v1811
        %v1813 = vrot.slane %v1799, %v1812
        %v1814 = vcombine.high %v1790, 0.0
        %v1815 = vcombine.high %v1797, 0.0
        %v1816 = vcombine.high %v1806, 0.0
        %v1817 = vcombine.high %v1813, 0.0
        %v1818 = vcombine.low %v1790, %v1797
        %v1820 = vunpack.c.l.s4 1983009808
        %v1821 = vunpack.c.0.s8 %v1820
        %v1822 = vlaneseq
        %v1823 = vshrl.u32 %v1822, 7
        %v1824 = vsub.s32 %v1821, %v1823
        %v1825 = vrot.slane %v1818, %v1824
        %v1826 = vcombine.low %v1814, %v1815
        %v1828 = vunpack.c.l.s4 1983009808
        %v1829 = vunpack.c.0.s8 %v1828
        %v1830 = vlaneseq
        %v1831 = vshrl.u32 %v1830, 7
        %v1832 = vsub.s32 %v1829, %v1831
        %v1833 = vrot.slane %v1826, %v1832
        %v1834 = vcombine.low %v1806, %v1813
        %v1836 = vunpack.c.l.s4 1983009808
        %v1837 = vunpack.c.0.s8 %v1836
        %v1838 = vlaneseq
        %v1839 = vshrl.u32 %v1838, 7
        %v1840 = vsub.s32 %v1837, %v1839
        %v1841 = vrot.slane %v1834, %v1840
        %v1842 = vcombine.low %v1816, %v1817
        %v1844 = vunpack.c.l.s4 1983009808
        %v1845 = vunpack.c.0.s8 %v1844
        %v1846 = vlaneseq
        %v1847 = vshrl.u32 %v1846, 7
        %v1848 = vsub.s32 %v1845, %v1847
        %v1849 = vrot.slane %v1842, %v1848
        %v1850 = vcombine.low %v1825, %v1833
        %v1851 = vcombine.high %v1825, %v1833
        %v1853 = vunpack.c.l.s4 1934713408
        %v1854 = vunpack.c.0.s8 %v1853
        %v1855 = vlaneseq
        %v1856 = vshrl.u32 %v1855, 7
        %v1857 = vsub.s32 %v1854, %v1856
        %v1858 = vrot.slane %v1850, %v1857
        %v1860 = vunpack.c.l.s4 1934713408
        %v1861 = vunpack.c.0.s8 %v1860
        %v1862 = vlaneseq
        %v1863 = vshrl.u32 %v1862, 7
        %v1864 = vsub.s32 %v1861, %v1863
        %v1865 = vrot.slane %v1851, %v1864
        %v1866 = vcombine.low %v1841, %v1849
        %v1867 = vcombine.high %v1841, %v1849
        %v1869 = vunpack.c.l.s4 1934713408
        %v1870 = vunpack.c.0.s8 %v1869
        %v1871 = vlaneseq
        %v1872 = vshrl.u32 %v1871, 7
        %v1873 = vsub.s32 %v1870, %v1872
        %v1874 = vrot.slane %v1866, %v1873
        %v1876 = vunpack.c.l.s4 1934713408
        %v1877 = vunpack.c.0.s8 %v1876
        %v1878 = vlaneseq
        %v1879 = vshrl.u32 %v1878, 7
        %v1880 = vsub.s32 %v1877, %v1879
        %v1881 = vrot.slane %v1867, %v1880
        %v1882 = vcombine.low %v1858, %v1874
        %v1883 = vcombine.high %v1858, %v1874
        %v1884 = vcombine.low %v1865, %v1881
        %v1885 = vcombine.high %v1865, %v1881
        %1887 = vrot.lane.b32.xlu0 %v1883, 8
        %v1888 = vpop.permute.xlu0 %1887
        %1891 = vrot.lane.b32.xlu0 %v1884, 16
        %v1892 = vpop.permute.xlu0 %1891
        %1895 = vrot.lane.b32.xlu0 %v1885, 24
        %v1896 = vpop.permute.xlu0 %1895
        %v1898 = vsel %vm1092, %v1882, %v1888
        %vm1899 = vcmask 130048
        %v1900 = vsel %vm1899, %v1898, %v1892
        %vm1901 = vcmask 195584
        %v1902 = vsel %vm1901, %v1900, %v1896
        %v1903 = vld [vmem:[#allocation11] sm:$0xff]
        %v1904 = vld [vmem:[#allocation11 + $0x8] sm:$0xff]
        %v1905 = vld [vmem:[#allocation11 + $0x10] sm:$0xff]
        %v1906 = vld [vmem:[#allocation11 + $0x18] sm:$0xff]
        %v1908 = vsel %vm429, %v1902, 0
        %1910 = vmatprep.subr.mxu0 0.0
        %1911 = vmatpush1.msra.mxu0 %v1903
        %1912 = vmatprep.subr.mxu0 0.0
        %1913 = vmatpush1.msra.mxu0 %v1904
        %1914 = vmatprep.subr.mxu0 0.0
        %1915 = vmatpush1.msra.mxu0 %v1905
        %1916 = vmatprep.subr.mxu0 0.0
        %1917 = vmatpush1.msra.mxu0 %v1906
        %1918 = vmatprep.subr.mxu0 0.0
        %1919 = vmatpush1.msra.mxu0 0.0
        %1920 = vmatprep.subr.mxu0 0.0
        %1921 = vmatpush1.msra.mxu0 0.0
        %1922 = vmatprep.subr.mxu0 0.0
        %1923 = vmatpush1.msra.mxu0 0.0
        %1924 = vmatprep.subr.mxu0 0.0
        %1925 = vmatpush1.msra.mxu0 0.0
        %1926 = vmatprep.subr.mxu0 0.0
        %1927 = vmatpush1.msra.mxu0 0.0
        %1928 = vmatprep.subr.mxu0 0.0
        %1929 = vmatpush1.msra.mxu0 0.0
        %1930 = vmatprep.subr.mxu0 0.0
        %1931 = vmatpush1.msra.mxu0 0.0
        %1932 = vmatprep.subr.mxu0 0.0
        %1933 = vmatpush1.msra.mxu0 0.0
        %1934 = vmatprep.subr.mxu0 0.0
        %1935 = vmatpush1.msra.mxu0 0.0
        %1936 = vmatprep.subr.mxu0 0.0
        %1937 = vmatpush1.msra.mxu0 0.0
        %1938 = vmatprep.subr.mxu0 0.0
        %1939 = vmatpush1.msra.mxu0 0.0
        %1940 = vmatprep.subr.mxu0 0.0
        %1941 = vmatpush1.msra.mxu0 0.0
        %1942 = vmatprep.subr.mxu0 0.0
        %1943 = vmatpush1.msra.mxu0 0.0
        %1944 = vmatprep.subr.mxu0 0.0
        %1945 = vmatpush1.msra.mxu0 0.0
        %1946 = vmatprep.subr.mxu0 0.0
        %1947 = vmatpush1.msra.mxu0 0.0
        %1948 = vmatprep.subr.mxu0 0.0
        %1949 = vmatpush1.msra.mxu0 0.0
        %1950 = vmatprep.subr.mxu0 0.0
        %1951 = vmatpush1.msra.mxu0 0.0
        %1952 = vmatprep.subr.mxu0 0.0
        %1953 = vmatpush1.msra.mxu0 0.0
        %1954 = vmatprep.subr.mxu0 0.0
        %1955 = vmatpush1.msra.mxu0 0.0
        %1956 = vmatprep.subr.mxu0 0.0
        %1957 = vmatpush1.msra.mxu0 0.0
        %1958 = vmatprep.subr.mxu0 0.0
        %1959 = vmatpush1.msra.mxu0 0.0
        %1960 = vmatprep.subr.mxu0 0.0
        %1961 = vmatpush1.msra.mxu0 0.0
        %1962 = vmatprep.subr.mxu0 0.0
        %1963 = vmatpush1.msra.mxu0 0.0
        %1964 = vmatprep.subr.mxu0 0.0
        %1965 = vmatpush1.msra.mxu0 0.0
        %1966 = vmatprep.subr.mxu0 0.0
        %1967 = vmatpush1.msra.mxu0 0.0
        %1968 = vmatprep.subr.mxu0 0.0
        %1969 = vmatpush1.msra.mxu0 0.0
        %1970 = vmatprep.subr.mxu0 0.0
        %1971 = vmatpush1.msra.mxu0 0.0
        %1972 = vmatprep.subr.mxu0 0.0
        %1973 = vmatpush1.msra.mxu0 0.0
        %1974 = vmatprep.mubr.f32.mxu0 0.0
        %1975 = vmatmul.mubr.f32.gmra.mrb[0].mxu0 %v1908
        %v1976 = vpop.f32.mrb[0].mxu0
        %v1977 = vadd.f32 0.0, %v1976
        %v1978 = vpop.f32.mrb[0].mxu0
        %1979 = vdwg.mxu0
        %p1980 = scmp.eq.s32.totalorder %s37, 0
        // Predicated region
        $region65: #{tpu_custom_call.1} parent=43 // pred_check
          %p1981 = pneg %p1980
        $region66: #{tpu_custom_call.1} parent=43 // pred_check_branch
          %1983 = sbr.rel (%p1981) target = $region68
        $region67: #{tpu_custom_call.1} parent=43 // pred_region
          %v1984 = vld [vmem:[%s5] sm:$0x1]
          %v1986 = vlaneseq
          %v1987 = vshrl.u32 %v1986, 7
          %v1988 = vsub.s32 0, %v1987
          %v1989 = vrot.slane %v1984, %v1988
          %1991 = vst.msk [vmem:[#allocation2] sm:$0xff] %vm429, %v1989
        $region68: #{tpu_custom_call.1} parent=43 // pred_fallthru
          _
        %v1992 = vld [vmem:[#allocation2] sm:$0xff]
        %v1993 = vadd.f32 %v1992, %v1977
        %1994 = vst.msk [vmem:[#allocation2] sm:$0xff] %vm429, %v1993
        // Predicated region
        $region69: #{tpu_custom_call.1} parent=43 // pred_check
          %p1995 = pneg %p1980
        $region70: #{tpu_custom_call.1} parent=43 // pred_check_branch
          %1997 = sbr.rel (%p1995) target = $region72
        $region71: #{tpu_custom_call.1} parent=43 // pred_region
          %v1998 = vld [vmem:[#allocation2] sm:$0xff]
          %1999 = vst.msk [vmem:[%s412] sm:$0xff] %vm429, %v1998
        $region72: #{tpu_custom_call.1} parent=43 // pred_fallthru
          _
        %s2000 = sand.u32 %s210, 1
        %s2001 = scalar_lea.sflag [#allocation5], %s2000
        %s2002 = sand.u32 %s210, 1
        %s2003 = smul.addr %s2002, 8
        %s2004 = scalar_lea.vmem [#allocation12], %s2003
        %s2005 = sand.u32 %s240, 1
        %s2006 = scalar_lea.sflag [#allocation14], %s2005
        %s2007 = sand.u32 %s240, 1
        %s2008 = smul.addr %s2007, 32
        %s2009 = scalar_lea.vmem [#allocation13], %s2008
        // Predicated region
        $region73: #{tpu_custom_call.1} parent=43 // pred_check
          %p2010 = pneg %p220
        $region74: #{tpu_custom_call.1} parent=43 // pred_check_branch
          %2012 = sbr.rel (%p2010) target = $region76
        $region75: #{tpu_custom_call.1} parent=43 // pred_region
          %s2014 = ssub.s32 128, 128
          %2015 = vsyncadd %s2001, %s2014
          %s2016 = sadd.s32 %s36, %s35
          %s2017 = smul.addr %s2016, 128
          %s2018 = scalar_lea.hbm %s6, %s2017
          %s2020 = sshll.u32 %s2004, 4
          %s2021 = int_to_ptr.vmem [resolvable:$true] %s2020
          %2023 = dma.vmem_to_hbm [thread:$0]  %s2021, 128, %s2018, %s2001
        $region76: #{tpu_custom_call.1} parent=43 // pred_fallthru
          _
        // Predicated region
        $region77: #{tpu_custom_call.1} parent=43 // pred_check
          %p2024 = pneg %p250
        $region78: #{tpu_custom_call.1} parent=43 // pred_check_branch
          %2026 = sbr.rel (%p2024) target = $region80
        $region79: #{tpu_custom_call.1} parent=43 // pred_region
          %s2027 = smul.u32 4, %s37
          %s2029 = ssub.s32 512, 512
          %2030 = vsyncadd %s2006, %s2029
          %s2031 = sadd.s32 %s36, %s2027
          %s2032 = smul.addr %s35, 4
          %s2033 = sadd.s32 %s2031, %s2032
          %s2034 = smul.addr %s2033, 128
          %s2035 = scalar_lea.hbm %s7, %s2034
          %s2036 = sshll.u32 %s2009, 4
          %s2037 = int_to_ptr.vmem [resolvable:$true] %s2036
          %2042 = dma.vmem_to_hbm [thread:$0]  %s2037, 512, %s2035, %s2006, 128, 128, 8
        $region80: #{tpu_custom_call.1} parent=43 // pred_fallthru
          _
      $region44: #{tpu_custom_call.1} parent=5 // pred_fallthru
        _
      %p2043 = scmp.le.s32.totalorder 2, %s25
      // Predicated region
      $region81: #{tpu_custom_call.1} parent=5 // pred_check
        %p2044 = pneg %p2043
      $region82: #{tpu_custom_call.1} parent=5 // pred_check_branch
        %2046 = sbr.rel (%p2044) target = $region84
      $region83: #{tpu_custom_call.1} parent=5 // pred_region
        %s2047 = ssub.s32 %s25, 2
        // Predicated region
        $region85: #{tpu_custom_call.1} parent=83 // pred_check
          %p2048 = pneg %p226
        $region86: #{tpu_custom_call.1} parent=83 // pred_check_branch
          %2050 = sbr.rel (%p2048) target = $region88
        $region87: #{tpu_custom_call.1} parent=83 // pred_region
          %s2051 = sand.u32 %s211, 1
          %s2052 = scalar_lea.sflag [#allocation5], %s2051
          %s2053 = sand.u32 %s211, 1
          %s2054 = smul.addr %s2053, 8
          %s2055 = scalar_lea.vmem [#allocation12], %s2054
          %2056 = dma.done %s2052, 128
        $region88: #{tpu_custom_call.1} parent=83 // pred_fallthru
          _
        // Predicated region
        $region89: #{tpu_custom_call.1} parent=83 // pred_check
          %p2057 = pneg %p256
        $region90: #{tpu_custom_call.1} parent=83 // pred_check_branch
          %2059 = sbr.rel (%p2057) target = $region92
        $region91: #{tpu_custom_call.1} parent=83 // pred_region
          %s2060 = sand.u32 %s241, 1
          %s2061 = scalar_lea.sflag [#allocation14], %s2060
          %s2062 = sand.u32 %s241, 1
          %s2063 = smul.addr %s2062, 32
          %s2064 = scalar_lea.vmem [#allocation13], %s2063
          %2065 = dma.done %s2061, 512
        $region92: #{tpu_custom_call.1} parent=83 // pred_fallthru
          _
      $region84: #{tpu_custom_call.1} parent=5 // pred_fallthru
        _
    $region6: #{tpu_custom_call.1} parent=1 // loop_footer
      %s29 = sadd.s32 1, %s25
    $region7: #{tpu_custom_call.1} parent=1 // loop_footer_branch
      %24 = sbr.rel target = $region3
    $region8: #{tpu_custom_call.1} parent=1 // loop_exit
      _
    %2066 = vsyncpa [#allocation4], 1
    %s2067 = scalar_lea.sflag [#allocation4], 1
    %2068 = vsyncpa %s2067, 1
    %2069 = vsyncpa [#allocation7], 1
    %2070 = vsyncpa [#allocation10], 1
    %2071 = vsyncpa [#allocation5], 1
    %s2072 = scalar_lea.sflag [#allocation5], 1
    %2073 = vsyncpa %s2072, 1
    %2074 = vsyncpa [#allocation14], 1
    %s2075 = scalar_lea.sflag [#allocation14], 1
    %2076 = vsyncpa %s2075, 1

</llo_original>
